<compile_context>
chip_gen: v7x
topology: tpu7x:2x2x1
jax: 0.10.0
libtpu: 0.0.40
codegen_flags: <defaults>
</compile_context>

<pallas_src>
import functools

import jax
import jax.numpy as jnp
from jax.experimental import pallas as pl
from jax.experimental.pallas import tpu as pltpu

_LN_EPS = 1e-5


# ---------------------- chip-aware sizing (v5e / v6e / v7x) ---------------------- #

def _tpu_vmem_capacity_bytes():
    try:
        return int(pltpu.get_tpu_info().vmem_capacity_bytes)
    except Exception:
        return 128 * 1024 * 1024                     # v5e/v6e default

_VMEM_CAP = _tpu_vmem_capacity_bytes()
# Explicit scoped-VMEM ceiling (defaults are only 16/32 MiB): ~96 MiB on 128-MiB chips,
# 48 MiB on v7x (64 MiB physical).
_VMEM_LIMIT = int(min(100 * 1024 * 1024, (_VMEM_CAP * 3) // 4))
# Row-tile cap for the per-token kernels: 512 on v5e/v6e, 256 on v7x.
_ROW_CAP = 512 if _VMEM_CAP >= (96 << 20) else 256


def _cp(n_axes=1):
    return pltpu.CompilerParams(
        dimension_semantics=("parallel",) * n_axes,
        vmem_limit_bytes=_VMEM_LIMIT)


# ------------------------------ small helpers ------------------------------ #

def _row_tile(n):
    """Row tile: >=8-aligned, capped for VMEM; rows are padded to a multiple of it."""
    if n <= _ROW_CAP:
        return max(8, -(-n // 8) * 8)
    for t in (512, 384, 256, 128):
        if t <= _ROW_CAP and n % t == 0:
            return t
    return min(_ROW_CAP, 256)                         # caller pads N up to a multiple


def _pad_rows(x, tm):
    n = x.shape[0]
    pad = (-n) % tm
    if pad:
        x = jnp.pad(x, ((0, pad), (0, 0)))
    return x, n


def _mxu_dot(a, b):
    """bf16 operands on the MXU, f32 accumulation."""
    return jnp.dot(a.astype(jnp.bfloat16), b.astype(jnp.bfloat16),
                   preferred_element_type=jnp.float32)


def _ln(y, g, b, eps=_LN_EPS):
    """f32 LayerNorm math (shared by kernels and the pure-JAX reference)."""
    mu = jnp.mean(y, axis=-1, keepdims=True)
    var = jnp.mean((y - mu) * (y - mu), axis=-1, keepdims=True)
    return (y - mu) * jax.lax.rsqrt(var + eps) * g + b


def _row_spec(tm, d):
    return pl.BlockSpec((tm, d), lambda i: (i, 0))


def _resident(shape):
    # Weight / bias / LN-param block: same block every grid step -> stays VMEM resident.
    # TODO(synk): mark pipeline_mode=pl.Buffered(1) (single buffer for invariant blocks)
    # once verified on the target jax build; halves resident-weight VMEM on v7x.
    return pl.BlockSpec(shape, lambda i: (0, 0))


# ----------------------------- Pallas kernels ------------------------------ #

def _attn_heads_into(heads_ref, q, k, v, n_heads, scale, causal):
    """Per-head softmax(QK^T/sqrt(dh)) V written into a [Lq, D] VMEM scratch.

    No kh.T (dot_general contracts the last dims) and no H-way lane concatenate.
    """
    lq, d = q.shape
    lk = k.shape[0]
    dh = d // n_heads
    # TODO(synk): per-head contraction width is dh (<256); for compute-bound shapes on
    # v6e/v7x consider query-block tiling + batching heads onto the MXU K side.
    for h in range(n_heads):                           # static unrolled head loop
        qh = q[:, h * dh:(h + 1) * dh].astype(jnp.bfloat16)
        kh = k[:, h * dh:(h + 1) * dh].astype(jnp.bfloat16)
        vh = v[:, h * dh:(h + 1) * dh].astype(jnp.bfloat16)
        s = jax.lax.dot_general(qh, kh, (((1,), (1,)), ((), ())),
                                preferred_element_type=jnp.float32) * scale
        if causal:
            row = jax.lax.broadcasted_iota(jnp.int32, (lq, lk), 0)
            col = jax.lax.broadcasted_iota(jnp.int32, (lq, lk), 1)
            s = jnp.where(col <= row, s, -1e30)
        s = s - jnp.max(s, axis=-1, keepdims=True)     # f32 softmax
        p = jnp.exp(s)
        p = p * pl.reciprocal(jnp.sum(p, axis=-1, keepdims=True), approx=True)
        heads_ref[:, h * dh:(h + 1) * dh] = jnp.dot(
            p.astype(jnp.bfloat16), vh, preferred_element_type=jnp.float32)


def _self_attn_kernel(x_ref, wqkv_ref, bqkv_ref, wo_ref, bo_ref, g_ref, b_ref,
                      o_ref, heads_ref, *, n_heads, scale, causal):
    # LayerNorm(x + W_O @ MHA(QKV(x)))  -- everything fused, one batch element per step
    x = x_ref[0].astype(jnp.float32)                   # [L, D]
    d = x.shape[-1]
    qkv = _mxu_dot(x, wqkv_ref[...]) + bqkv_ref[...]   # fused Q/K/V projection [L, 3D]
    _attn_heads_into(heads_ref, qkv[:, :d], qkv[:, d:2 * d], qkv[:, 2 * d:],
                     n_heads, scale, causal)
    y = _mxu_dot(heads_ref[...], wo_ref[...]) + bo_ref[...] + x   # out-proj (K = D) + residual
    o_ref[0] = _ln(y, g_ref[...], b_ref[...]).astype(o_ref.dtype)


def _cross_attn_kernel(x_ref, c_ref, wq_ref, bq_ref, wkv_ref, bkv_ref,
                       wo_ref, bo_ref, g_ref, b_ref, o_ref, heads_ref,
                       *, n_heads, scale):
    # LayerNorm(x + W_O @ MHA(Q(x), KV(cross)))
    x = x_ref[0].astype(jnp.float32)                   # [Lq, D]
    c = c_ref[0]                                       # [Lk, D] bf16
    d = x.shape[-1]
    q = _mxu_dot(x, wq_ref[...]) + bq_ref[...]
    kv = _mxu_dot(c, wkv_ref[...]) + bkv_ref[...]      # fused K/V projection [Lk, 2D]
    _attn_heads_into(heads_ref, q, kv[:, :d], kv[:, d:], n_heads, scale, False)
    y = _mxu_dot(heads_ref[...], wo_ref[...]) + bo_ref[...] + x
    o_ref[0] = _ln(y, g_ref[...], b_ref[...]).astype(o_ref.dtype)


def _ffn_res_ln_kernel(x_ref, w1_ref, b1_ref, w2_ref, b2_ref, g_ref, bb_ref, o_ref):
    # LayerNorm(x + conv2(relu(conv1(x))))  -- Conv1d kernel_size=1 == per-token linear
    x = x_ref[...].astype(jnp.float32)
    h = jnp.maximum(_mxu_dot(x, w1_ref[...]) + b1_ref[...], 0.0)
    y = x + _mxu_dot(h, w2_ref[...]) + b2_ref[...]
    o_ref[...] = _ln(y, g_ref[...], bb_ref[...]).astype(o_ref.dtype)


def _ln_linear_kernel(x_ref, g_ref, bb_ref, w_ref, b_ref, o_ref):
    # final decoder LayerNorm + projection fused (lane-dense, padded output width)
    y = _ln(x_ref[...].astype(jnp.float32), g_ref[...], bb_ref[...])
    o_ref[...] = (_mxu_dot(y, w_ref[...]) + b_ref[...]).astype(o_ref.dtype)


# ------------------------------ pallas wrappers ----------------------------- #

def pallas_self_attention_block(x, p, gamma, beta, n_heads, scale, causal):
    """LayerNorm(x + OutProj(MHA(QKVProj(x)))) ; x: [B, L, D] f32."""
    b, l, d = x.shape
    # TODO(synk): for long sequences on v7x, tile over query blocks (grid=(B, L//tq))
    # with online softmax; grid=(B,) keeps the whole [L,3D] + [L,L] score resident.
    return pl.pallas_call(
        functools.partial(_self_attn_kernel, n_heads=n_heads, scale=scale, causal=causal),
        out_shape=jax.ShapeDtypeStruct((b, l, d), jnp.float32),
        grid=(b,),
        in_specs=[pl.BlockSpec((1, l, d), lambda i: (i, 0, 0)),
                  _resident((d, 3 * d)),
                  _resident((1, 3 * d)),
                  _resident((d, d)),
                  _resident((1, d)),
                  _resident((1, d)),
                  _resident((1, d))],
        out_specs=pl.BlockSpec((1, l, d), lambda i: (i, 0, 0)),
        scratch_shapes=[pltpu.VMEM((l, d), jnp.float32)],
        compiler_params=_cp(1),
    )(x, p["w_qkv"], p["b_qkv"].reshape(1, 3 * d), p["wo"], p["bo"].reshape(1, d),
      gamma.reshape(1, d), beta.reshape(1, d))


def pallas_cross_attention_block(x, cross_bf16, p, gamma, beta, n_heads, scale):
    """LayerNorm(x + OutProj(MHA(QProj(x), KVProj(cross)))) ; cross kept bf16."""
    b, lq, d = x.shape
    lk = cross_bf16.shape[1]
    return pl.pallas_call(
        functools.partial(_cross_attn_kernel, n_heads=n_heads, scale=scale),
        out_shape=jax.ShapeDtypeStruct((b, lq, d), jnp.float32),
        grid=(b,),
        in_specs=[pl.BlockSpec((1, lq, d), lambda i: (i, 0, 0)),
                  pl.BlockSpec((1, lk, d), lambda i: (i, 0, 0)),
                  _resident((d, d)),
                  _resident((1, d)),
                  _resident((d, 2 * d)),
                  _resident((1, 2 * d)),
                  _resident((d, d)),
                  _resident((1, d)),
                  _resident((1, d)),
                  _resident((1, d))],
        out_specs=pl.BlockSpec((1, lq, d), lambda i: (i, 0, 0)),
        scratch_shapes=[pltpu.VMEM((lq, d), jnp.float32)],
        compiler_params=_cp(1),
    )(x, cross_bf16, p["wq"], p["bq"].reshape(1, d),
      p["w_kv"], p["b_kv"].reshape(1, 2 * d), p["wo"], p["bo"].reshape(1, d),
      gamma.reshape(1, d), beta.reshape(1, d))


def pallas_ffn_res_ln(x, w1, b1, w2, b2, gamma, beta):
    """LayerNorm(x + relu(x @ w1 + b1) @ w2 + b2); rows padded to a tile multiple."""
    _, d = x.shape
    dff = w1.shape[1]
    tm = _row_tile(x.shape[0])
    xp, n0 = _pad_rows(x, tm)
    n = xp.shape[0]
    out = pl.pallas_call(
        _ffn_res_ln_kernel,
        out_shape=jax.ShapeDtypeStruct((n, d), jnp.float32),
        grid=(n // tm,),
        in_specs=[_row_spec(tm, d),
                  _resident((d, dff)),
                  _resident((1, dff)),
                  _resident((dff, d)),
                  _resident((1, d)),
                  _resident((1, d)),
                  _resident((1, d))],
        out_specs=_row_spec(tm, d),
        compiler_params=_cp(1),
    )(xp, w1, b1.reshape(1, dff), w2, b2.reshape(1, d),
      gamma.reshape(1, d), beta.reshape(1, d))
    return out[:n0]


def pallas_ln_linear(x, gamma, beta, w, b):
    """LayerNorm(x) @ w + b; projection width zero-padded to a lane-dense multiple of 128."""
    _, d = x.shape
    c_out = w.shape[1]
    dpad = max(128, -(-c_out // 128) * 128)
    if dpad != c_out:
        w = jnp.pad(w, ((0, 0), (0, dpad - c_out)))
        b = jnp.pad(b, ((0, dpad - c_out),))
    tm = _row_tile(x.shape[0])
    xp, n0 = _pad_rows(x, tm)
    n = xp.shape[0]
    out = pl.pallas_call(
        _ln_linear_kernel,
        out_shape=jax.ShapeDtypeStruct((n, dpad), jnp.float32),
        grid=(n // tm,),
        in_specs=[_row_spec(tm, d),
                  _resident((1, d)),
                  _resident((1, d)),
                  _resident((d, dpad)),
                  _resident((1, dpad))],
        out_specs=_row_spec(tm, dpad),
        compiler_params=_cp(1),
    )(xp, gamma.reshape(1, d), beta.reshape(1, d), w, b.reshape(1, dpad))
    return out[:n0, :c_out]


# --------------------------- model (glue in JAX) ---------------------------- #

def decoder_layer(p, x, cross_bf16, n_heads, x_mask=None, cross_mask=None):
    b, l, d = x.shape
    dh = d // n_heads
    scale = 1.0 / (dh ** 0.5)
    causal = isinstance(x_mask, str) and x_mask == "causal"
    # TODO(synk): arbitrary tensor-valued x_mask / cross_mask not supported (None/"causal" only).

    x = pallas_self_attention_block(x, p["self_attn"], p["norm1_g"], p["norm1_b"],
                                    n_heads, scale, causal)
    x = pallas_cross_attention_block(x, cross_bf16, p["cross_attn"],
                                     p["norm2_g"], p["norm2_b"], n_heads, scale)
    xf = pallas_ffn_res_ln(x.reshape(b * l, d), p["conv1_w"], p["conv1_b"],
                           p["conv2_w"], p["conv2_b"], p["norm3_g"], p["norm3_b"])
    return xf.reshape(b, l, d)


def decoder_forward(params, x, cross, x_mask=None, cross_mask=None, tau=None, delta=None):
    # TODO(synk): tau/delta (de-stationary factors) are None in the default forward; not modeled.
    b, l, d = x.shape
    cross_bf16 = cross.astype(jnp.bfloat16)   # only ever an MXU operand -> halve its HBM bytes
    for lp in params["layers"]:
        x = decoder_layer(lp, x, cross_bf16, params["n_heads"],
                          x_mask=x_mask, cross_mask=cross_mask)
    out = pallas_ln_linear(x.reshape(b * l, d), params["norm_g"], params["norm_b"],
                           params["proj_w"], params["proj_b"])
    return out.reshape(b, l, params["proj_w"].shape[1])


# ------------------------- pure-JAX reference check ------------------------- #
# Mirrors the kernel's numerical contract: bf16 MXU operands, f32 accumulation,
# f32 elementwise / softmax / LayerNorm.

def _bdot(a, b):
    return jnp.dot(a.astype(jnp.bfloat16), b.astype(jnp.bfloat16),
                   preferred_element_type=jnp.float32)


def _ref_mha(q, k, v, h, scale, causal=False):
    b, lq, d = q.shape
    lk = k.shape[1]
    dh = d // h
    qh = q.reshape(b, lq, h, dh).transpose(0, 2, 1, 3)
    kh = k.reshape(b, lk, h, dh).transpose(0, 2, 1, 3)
    vh = v.reshape(b, lk, h, dh).transpose(0, 2, 1, 3)
    s = jnp.einsum("bhqd,bhkd->bhqk", qh.astype(jnp.bfloat16), kh.astype(jnp.bfloat16),
                   preferred_element_type=jnp.float32) * scale
    if causal:
        row = jax.lax.broadcasted_iota(jnp.int32, (lq, lk), 0)
        col = jax.lax.broadcasted_iota(jnp.int32, (lq, lk), 1)
        s = jnp.where(col <= row, s, -1e30)
    p = jax.nn.softmax(s, axis=-1)
    o = jnp.einsum("bhqk,bhkd->bhqd", p.astype(jnp.bfloat16), vh.astype(jnp.bfloat16),
                   preferred_element_type=jnp.float32)
    return o.transpose(0, 2, 1, 3).reshape(b, lq, d)


def _ref_decoder(params, x, cross):
    h = params["n_heads"]
    d = x.shape[-1]
    scale = 1.0 / ((d // h) ** 0.5)
    for p in params["layers"]:
        sa = p["self_attn"]
        qkv = _bdot(x, sa["w_qkv"]) + sa["b_qkv"]
        a = _ref_mha(qkv[..., :d], qkv[..., d:2 * d], qkv[..., 2 * d:], h, scale)
        x = _ln(_bdot(a, sa["wo"]) + sa["bo"] + x, p["norm1_g"], p["norm1_b"])
        ca = p["cross_attn"]
        q = _bdot(x, ca["wq"]) + ca["bq"]
        kv = _bdot(cross, ca["w_kv"]) + ca["b_kv"]
        a = _ref_mha(q, kv[..., :d], kv[..., d:], h, scale)
        x = _ln(_bdot(a, ca["wo"]) + ca["bo"] + x, p["norm2_g"], p["norm2_b"])
        y = jnp.maximum(_bdot(x, p["conv1_w"]) + p["conv1_b"], 0.0)
        y = x + _bdot(y, p["conv2_w"]) + p["conv2_b"]
        x = _ln(y, p["norm3_g"], p["norm3_b"])
    x = _ln(x, params["norm_g"], params["norm_b"])
    return _bdot(x, params["proj_w"]) + params["proj_b"]


# ------------------------------- param init -------------------------------- #

def _w(key, shape):
    return (0.05 * jax.random.normal(key, shape, jnp.float32)).astype(jnp.bfloat16)


def _init_self_attn(key, d):
    k1, k2 = jax.random.split(key)
    return {"w_qkv": _w(k1, (d, 3 * d)), "b_qkv": jnp.zeros((3 * d,), jnp.float32),
            "wo": _w(k2, (d, d)), "bo": jnp.zeros((d,), jnp.float32)}


def _init_cross_attn(key, d):
    k1, k2, k3 = jax.random.split(key, 3)
    return {"wq": _w(k1, (d, d)), "bq": jnp.zeros((d,), jnp.float32),
            "w_kv": _w(k2, (d, 2 * d)), "b_kv": jnp.zeros((2 * d,), jnp.float32),
            "wo": _w(k3, (d, d)), "bo": jnp.zeros((d,), jnp.float32)}


def init_decoder_params(key, num_layers, d_model, d_ff, n_heads, c_out):
    layers = []
    for _ in range(num_layers):
        key, k1, k2, k3, k4 = jax.random.split(key, 5)
        layers.append({
            "self_attn": _init_self_attn(k1, d_model),
            "cross_attn": _init_cross_attn(k2, d_model),
            "conv1_w": _w(k3, (d_model, d_ff)), "conv1_b": jnp.zeros((d_ff,), jnp.float32),
            "conv2_w": _w(k4, (d_ff, d_model)), "conv2_b": jnp.zeros((d_model,), jnp.float32),
            "norm1_g": jnp.ones((d_model,), jnp.float32), "norm1_b": jnp.zeros((d_model,), jnp.float32),
            "norm2_g": jnp.ones((d_model,), jnp.float32), "norm2_b": jnp.zeros((d_model,), jnp.float32),
            "norm3_g": jnp.ones((d_model,), jnp.float32), "norm3_b": jnp.zeros((d_model,), jnp.float32),
        })
    key, kp = jax.random.split(key)
    return {
        "layers": layers,
        "n_heads": n_heads,
        "norm_g": jnp.ones((d_model,), jnp.float32),
        "norm_b": jnp.zeros((d_model,), jnp.float32),
        "proj_w": _w(kp, (d_model, c_out)),
        "proj_b": jnp.zeros((c_out,), jnp.float32),
    }


# ----------------------------------- main ----------------------------------- #

if __name__ == "__main__":
    B, L, S = 2, 8, 12          # batch, target seq, cross (encoder) seq
    D_MODEL, D_FF, N_HEADS = 32, 64, 4
    C_OUT, N_LAYERS = 4, 2

    root = jax.random.PRNGKey(0)
    kx, kc, kp = jax.random.split(root, 3)
    x = jax.random.normal(kx, (B, L, D_MODEL), jnp.float32)
    cross = jax.random.normal(kc, (B, S, D_MODEL), jnp.float32)
    params = init_decoder_params(kp, N_LAYERS, D_MODEL, D_FF, N_HEADS, C_OUT)

    out = decoder_forward(params, x, cross, x_mask=None, cross_mask=None, tau=None, delta=None)
    out = jax.block_until_ready(out)

    ref = _ref_decoder(params, x, cross)
    assert out.shape == (B, L, C_OUT), out.shape
    max_err = float(jnp.max(jnp.abs(out - ref)))
    assert jnp.allclose(out, ref, rtol=5e-3, atol=5e-3), max_err

    print("KERNEL_OK")
</pallas_src>

<mosaic_0001>
module attributes {stable_mosaic.version = 11 : i64} {
  func.func @_self_attn_kernel(%arg0: i32, %arg1: memref<1x8x32xf32, #tpu.memory_space<vmem>>, %arg2: memref<32x96xbf16, #tpu.memory_space<vmem>>, %arg3: memref<1x96xf32, #tpu.memory_space<vmem>>, %arg4: memref<32x32xbf16, #tpu.memory_space<vmem>>, %arg5: memref<1x32xf32, #tpu.memory_space<vmem>>, %arg6: memref<1x32xf32, #tpu.memory_space<vmem>>, %arg7: memref<1x32xf32, #tpu.memory_space<vmem>>, %arg8: memref<1x8x32xf32, #tpu.memory_space<vmem>>, %arg9: memref<8x32xf32, #tpu.memory_space<vmem>>) attributes {dimension_semantics = [#tpu.dimension_semantics<parallel>], iteration_bounds = array<i64: 2>, scalar_prefetch = 0 : i64, scratch_operands = 1 : i64, tpu.core_type = #tpu.core_type<tc>, window_params = [{transform_indices = @transform_0, window_bounds = array<i64: 1, 8, 32>}, {pipeline_mode = #tpu.pipeline_mode<synchronous>, transform_indices = @transform_1, window_bounds = array<i64: 32, 96>}, {pipeline_mode = #tpu.pipeline_mode<synchronous>, transform_indices = @transform_2, window_bounds = array<i64: 1, 96>}, {pipeline_mode = #tpu.pipeline_mode<synchronous>, transform_indices = @transform_3, window_bounds = array<i64: 32, 32>}, {pipeline_mode = #tpu.pipeline_mode<synchronous>, transform_indices = @transform_4, window_bounds = array<i64: 1, 32>}, {pipeline_mode = #tpu.pipeline_mode<synchronous>, transform_indices = @transform_5, window_bounds = array<i64: 1, 32>}, {pipeline_mode = #tpu.pipeline_mode<synchronous>, transform_indices = @transform_6, window_bounds = array<i64: 1, 32>}, {transform_indices = @transform_7, window_bounds = array<i64: 1, 8, 32>}]} {
    %c0 = arith.constant 0 : index
    %c0_0 = arith.constant 0 : index
    %c0_1 = arith.constant 0 : index
    %0 = vector.load %arg1[%c0, %c0_0, %c0_1] : memref<1x8x32xf32, #tpu.memory_space<vmem>>, vector<1x8x32xf32>
    %1 = vector.shape_cast %0 : vector<1x8x32xf32> to vector<8x32xf32>
    %c0_2 = arith.constant 0 : index
    %c0_3 = arith.constant 0 : index
    %2 = vector.load %arg2[%c0_2, %c0_3] : memref<32x96xbf16, #tpu.memory_space<vmem>>, vector<32x96xbf16>
    %3 = arith.truncf %1 : vector<8x32xf32> to vector<8x32xbf16>
    %cst = arith.constant dense<0.000000e+00> : vector<8x96xf32>
    %4 = tpu.matmul %3, %2, %cst {dimension_numbers = #tpu.dot_dimension_numbers<[1], [0], [0], [1], [0, 0, 1, 1], [], []>} : vector<8x32xbf16>, vector<32x96xbf16>, vector<8x96xf32> -> vector<8x96xf32>
    %c0_4 = arith.constant 0 : index
    %c0_5 = arith.constant 0 : index
    %5 = vector.load %arg3[%c0_4, %c0_5] : memref<1x96xf32, #tpu.memory_space<vmem>>, vector<1x96xf32>
    %6 = vector.broadcast %5 : vector<1x96xf32> to vector<8x96xf32>
    %7 = arith.addf %4, %6 : vector<8x96xf32>
    %8 = vector.extract_strided_slice %7 {offsets = [0, 0], sizes = [8, 32], strides = [1, 1]} : vector<8x96xf32> to vector<8x32xf32>
    %9 = vector.extract_strided_slice %7 {offsets = [0, 32], sizes = [8, 32], strides = [1, 1]} : vector<8x96xf32> to vector<8x32xf32>
    %10 = vector.extract_strided_slice %7 {offsets = [0, 64], sizes = [8, 32], strides = [1, 1]} : vector<8x96xf32> to vector<8x32xf32>
    %11 = vector.extract_strided_slice %8 {offsets = [0, 0], sizes = [8, 8], strides = [1, 1]} : vector<8x32xf32> to vector<8x8xf32>
    %12 = arith.truncf %11 : vector<8x8xf32> to vector<8x8xbf16>
    %13 = vector.extract_strided_slice %9 {offsets = [0, 0], sizes = [8, 8], strides = [1, 1]} : vector<8x32xf32> to vector<8x8xf32>
    %14 = arith.truncf %13 : vector<8x8xf32> to vector<8x8xbf16>
    %15 = vector.extract_strided_slice %10 {offsets = [0, 0], sizes = [8, 8], strides = [1, 1]} : vector<8x32xf32> to vector<8x8xf32>
    %16 = arith.truncf %15 : vector<8x8xf32> to vector<8x8xbf16>
    %cst_6 = arith.constant dense<0.000000e+00> : vector<8x8xf32>
    %17 = tpu.matmul %12, %14, %cst_6 {dimension_numbers = #tpu.dot_dimension_numbers<[1], [1], [0], [0], [0, 0, 1, 0], [], []>} : vector<8x8xbf16>, vector<8x8xbf16>, vector<8x8xf32> -> vector<8x8xf32>
    %cst_7 = arith.constant 0.353553385 : f32
    %18 = vector.broadcast %cst_7 : f32 to vector<8x8xf32>
    %19 = arith.mulf %17, %18 : vector<8x8xf32>
    %cst_8 = arith.constant dense<0xFF800000> : vector<8xf32>
    %20 = vector.multi_reduction <maximumf>, %19, %cst_8 [1] : vector<8x8xf32> to vector<8xf32>
    %21 = vector.shape_cast %20 : vector<8xf32> to vector<8x1xf32>
    %22 = vector.broadcast %21 : vector<8x1xf32> to vector<8x8xf32>
    %23 = arith.subf %19, %22 : vector<8x8xf32>
    %24 = math.exp %23 : vector<8x8xf32>
    %cst_9 = arith.constant dense<0.000000e+00> : vector<8xf32>
    %25 = vector.multi_reduction <add>, %24, %cst_9 [1] : vector<8x8xf32> to vector<8xf32>
    %26 = vector.shape_cast %25 : vector<8xf32> to vector<8x1xf32>
    %27 = tpu.reciprocal %26 {approx = true} : vector<8x1xf32> -> vector<8x1xf32>
    %28 = vector.broadcast %27 : vector<8x1xf32> to vector<8x8xf32>
    %29 = arith.mulf %24, %28 : vector<8x8xf32>
    %30 = arith.truncf %29 : vector<8x8xf32> to vector<8x8xbf16>
    %cst_10 = arith.constant dense<0.000000e+00> : vector<8x8xf32>
    %31 = tpu.matmul %30, %16, %cst_10 {dimension_numbers = #tpu.dot_dimension_numbers<[1], [0], [0], [1], [0, 0, 1, 1], [], []>} : vector<8x8xbf16>, vector<8x8xbf16>, vector<8x8xf32> -> vector<8x8xf32>
    %c0_11 = arith.constant 0 : index
    %c0_12 = arith.constant 0 : index
    %32 = vector.load %arg9[%c0_11, %c0_12] : memref<8x32xf32, #tpu.memory_space<vmem>>, vector<8x8xf32>
    tpu.vector_store %arg9[%c0_11, %c0_12], %31 {strides = array<i32>} : memref<8x32xf32, #tpu.memory_space<vmem>>, vector<8x8xf32>,
    %33 = vector.extract_strided_slice %8 {offsets = [0, 8], sizes = [8, 8], strides = [1, 1]} : vector<8x32xf32> to vector<8x8xf32>
    %34 = arith.truncf %33 : vector<8x8xf32> to vector<8x8xbf16>
    %35 = vector.extract_strided_slice %9 {offsets = [0, 8], sizes = [8, 8], strides = [1, 1]} : vector<8x32xf32> to vector<8x8xf32>
    %36 = arith.truncf %35 : vector<8x8xf32> to vector<8x8xbf16>
    %37 = vector.extract_strided_slice %10 {offsets = [0, 8], sizes = [8, 8], strides = [1, 1]} : vector<8x32xf32> to vector<8x8xf32>
    %38 = arith.truncf %37 : vector<8x8xf32> to vector<8x8xbf16>
    %cst_13 = arith.constant dense<0.000000e+00> : vector<8x8xf32>
    %39 = tpu.matmul %34, %36, %cst_13 {dimension_numbers = #tpu.dot_dimension_numbers<[1], [1], [0], [0], [0, 0, 1, 0], [], []>} : vector<8x8xbf16>, vector<8x8xbf16>, vector<8x8xf32> -> vector<8x8xf32>
    %cst_14 = arith.constant 0.353553385 : f32
    %40 = vector.broadcast %cst_14 : f32 to vector<8x8xf32>
    %41 = arith.mulf %39, %40 : vector<8x8xf32>
    %cst_15 = arith.constant dense<0xFF800000> : vector<8xf32>
    %42 = vector.multi_reduction <maximumf>, %41, %cst_15 [1] : vector<8x8xf32> to vector<8xf32>
    %43 = vector.shape_cast %42 : vector<8xf32> to vector<8x1xf32>
    %44 = vector.broadcast %43 : vector<8x1xf32> to vector<8x8xf32>
    %45 = arith.subf %41, %44 : vector<8x8xf32>
    %46 = math.exp %45 : vector<8x8xf32>
    %cst_16 = arith.constant dense<0.000000e+00> : vector<8xf32>
    %47 = vector.multi_reduction <add>, %46, %cst_16 [1] : vector<8x8xf32> to vector<8xf32>
    %48 = vector.shape_cast %47 : vector<8xf32> to vector<8x1xf32>
    %49 = tpu.reciprocal %48 {approx = true} : vector<8x1xf32> -> vector<8x1xf32>
    %50 = vector.broadcast %49 : vector<8x1xf32> to vector<8x8xf32>
    %51 = arith.mulf %46, %50 : vector<8x8xf32>
    %52 = arith.truncf %51 : vector<8x8xf32> to vector<8x8xbf16>
    %cst_17 = arith.constant dense<0.000000e+00> : vector<8x8xf32>
    %53 = tpu.matmul %52, %38, %cst_17 {dimension_numbers = #tpu.dot_dimension_numbers<[1], [0], [0], [1], [0, 0, 1, 1], [], []>} : vector<8x8xbf16>, vector<8x8xbf16>, vector<8x8xf32> -> vector<8x8xf32>
    %c0_18 = arith.constant 0 : index
    %c8 = arith.constant 8 : index
    %54 = vector.load %arg9[%c0_18, %c8] : memref<8x32xf32, #tpu.memory_space<vmem>>, vector<8x8xf32>
    tpu.vector_store %arg9[%c0_18, %c8], %53 {strides = array<i32>} : memref<8x32xf32, #tpu.memory_space<vmem>>, vector<8x8xf32>,
    %55 = vector.extract_strided_slice %8 {offsets = [0, 16], sizes = [8, 8], strides = [1, 1]} : vector<8x32xf32> to vector<8x8xf32>
    %56 = arith.truncf %55 : vector<8x8xf32> to vector<8x8xbf16>
    %57 = vector.extract_strided_slice %9 {offsets = [0, 16], sizes = [8, 8], strides = [1, 1]} : vector<8x32xf32> to vector<8x8xf32>
    %58 = arith.truncf %57 : vector<8x8xf32> to vector<8x8xbf16>
    %59 = vector.extract_strided_slice %10 {offsets = [0, 16], sizes = [8, 8], strides = [1, 1]} : vector<8x32xf32> to vector<8x8xf32>
    %60 = arith.truncf %59 : vector<8x8xf32> to vector<8x8xbf16>
    %cst_19 = arith.constant dense<0.000000e+00> : vector<8x8xf32>
    %61 = tpu.matmul %56, %58, %cst_19 {dimension_numbers = #tpu.dot_dimension_numbers<[1], [1], [0], [0], [0, 0, 1, 0], [], []>} : vector<8x8xbf16>, vector<8x8xbf16>, vector<8x8xf32> -> vector<8x8xf32>
    %cst_20 = arith.constant 0.353553385 : f32
    %62 = vector.broadcast %cst_20 : f32 to vector<8x8xf32>
    %63 = arith.mulf %61, %62 : vector<8x8xf32>
    %cst_21 = arith.constant dense<0xFF800000> : vector<8xf32>
    %64 = vector.multi_reduction <maximumf>, %63, %cst_21 [1] : vector<8x8xf32> to vector<8xf32>
    %65 = vector.shape_cast %64 : vector<8xf32> to vector<8x1xf32>
    %66 = vector.broadcast %65 : vector<8x1xf32> to vector<8x8xf32>
    %67 = arith.subf %63, %66 : vector<8x8xf32>
    %68 = math.exp %67 : vector<8x8xf32>
    %cst_22 = arith.constant dense<0.000000e+00> : vector<8xf32>
    %69 = vector.multi_reduction <add>, %68, %cst_22 [1] : vector<8x8xf32> to vector<8xf32>
    %70 = vector.shape_cast %69 : vector<8xf32> to vector<8x1xf32>
    %71 = tpu.reciprocal %70 {approx = true} : vector<8x1xf32> -> vector<8x1xf32>
    %72 = vector.broadcast %71 : vector<8x1xf32> to vector<8x8xf32>
    %73 = arith.mulf %68, %72 : vector<8x8xf32>
    %74 = arith.truncf %73 : vector<8x8xf32> to vector<8x8xbf16>
    %cst_23 = arith.constant dense<0.000000e+00> : vector<8x8xf32>
    %75 = tpu.matmul %74, %60, %cst_23 {dimension_numbers = #tpu.dot_dimension_numbers<[1], [0], [0], [1], [0, 0, 1, 1], [], []>} : vector<8x8xbf16>, vector<8x8xbf16>, vector<8x8xf32> -> vector<8x8xf32>
    %c0_24 = arith.constant 0 : index
    %c16 = arith.constant 16 : index
    %76 = vector.load %arg9[%c0_24, %c16] : memref<8x32xf32, #tpu.memory_space<vmem>>, vector<8x8xf32>
    tpu.vector_store %arg9[%c0_24, %c16], %75 {strides = array<i32>} : memref<8x32xf32, #tpu.memory_space<vmem>>, vector<8x8xf32>,
    %77 = vector.extract_strided_slice %8 {offsets = [0, 24], sizes = [8, 8], strides = [1, 1]} : vector<8x32xf32> to vector<8x8xf32>
    %78 = arith.truncf %77 : vector<8x8xf32> to vector<8x8xbf16>
    %79 = vector.extract_strided_slice %9 {offsets = [0, 24], sizes = [8, 8], strides = [1, 1]} : vector<8x32xf32> to vector<8x8xf32>
    %80 = arith.truncf %79 : vector<8x8xf32> to vector<8x8xbf16>
    %81 = vector.extract_strided_slice %10 {offsets = [0, 24], sizes = [8, 8], strides = [1, 1]} : vector<8x32xf32> to vector<8x8xf32>
    %82 = arith.truncf %81 : vector<8x8xf32> to vector<8x8xbf16>
    %cst_25 = arith.constant dense<0.000000e+00> : vector<8x8xf32>
    %83 = tpu.matmul %78, %80, %cst_25 {dimension_numbers = #tpu.dot_dimension_numbers<[1], [1], [0], [0], [0, 0, 1, 0], [], []>} : vector<8x8xbf16>, vector<8x8xbf16>, vector<8x8xf32> -> vector<8x8xf32>
    %cst_26 = arith.constant 0.353553385 : f32
    %84 = vector.broadcast %cst_26 : f32 to vector<8x8xf32>
    %85 = arith.mulf %83, %84 : vector<8x8xf32>
    %cst_27 = arith.constant dense<0xFF800000> : vector<8xf32>
    %86 = vector.multi_reduction <maximumf>, %85, %cst_27 [1] : vector<8x8xf32> to vector<8xf32>
    %87 = vector.shape_cast %86 : vector<8xf32> to vector<8x1xf32>
    %88 = vector.broadcast %87 : vector<8x1xf32> to vector<8x8xf32>
    %89 = arith.subf %85, %88 : vector<8x8xf32>
    %90 = math.exp %89 : vector<8x8xf32>
    %cst_28 = arith.constant dense<0.000000e+00> : vector<8xf32>
    %91 = vector.multi_reduction <add>, %90, %cst_28 [1] : vector<8x8xf32> to vector<8xf32>
    %92 = vector.shape_cast %91 : vector<8xf32> to vector<8x1xf32>
    %93 = tpu.reciprocal %92 {approx = true} : vector<8x1xf32> -> vector<8x1xf32>
    %94 = vector.broadcast %93 : vector<8x1xf32> to vector<8x8xf32>
    %95 = arith.mulf %90, %94 : vector<8x8xf32>
    %96 = arith.truncf %95 : vector<8x8xf32> to vector<8x8xbf16>
    %cst_29 = arith.constant dense<0.000000e+00> : vector<8x8xf32>
    %97 = tpu.matmul %96, %82, %cst_29 {dimension_numbers = #tpu.dot_dimension_numbers<[1], [0], [0], [1], [0, 0, 1, 1], [], []>} : vector<8x8xbf16>, vector<8x8xbf16>, vector<8x8xf32> -> vector<8x8xf32>
    %c0_30 = arith.constant 0 : index
    %c24 = arith.constant 24 : index
    %98 = vector.load %arg9[%c0_30, %c24] : memref<8x32xf32, #tpu.memory_space<vmem>>, vector<8x8xf32>
    tpu.vector_store %arg9[%c0_30, %c24], %97 {strides = array<i32>} : memref<8x32xf32, #tpu.memory_space<vmem>>, vector<8x8xf32>,
    %c0_31 = arith.constant 0 : index
    %c0_32 = arith.constant 0 : index
    %99 = vector.load %arg9[%c0_31, %c0_32] : memref<8x32xf32, #tpu.memory_space<vmem>>, vector<8x32xf32>
    %c0_33 = arith.constant 0 : index
    %c0_34 = arith.constant 0 : index
    %100 = vector.load %arg4[%c0_33, %c0_34] : memref<32x32xbf16, #tpu.memory_space<vmem>>, vector<32x32xbf16>
    %101 = arith.truncf %99 : vector<8x32xf32> to vector<8x32xbf16>
    %cst_35 = arith.constant dense<0.000000e+00> : vector<8x32xf32>
    %102 = tpu.matmul %101, %100, %cst_35 {dimension_numbers = #tpu.dot_dimension_numbers<[1], [0], [0], [1], [0, 0, 1, 1], [], []>} : vector<8x32xbf16>, vector<32x32xbf16>, vector<8x32xf32> -> vector<8x32xf32>
    %c0_36 = arith.constant 0 : index
    %c0_37 = arith.constant 0 : index
    %103 = vector.load %arg5[%c0_36, %c0_37] : memref<1x32xf32, #tpu.memory_space<vmem>>, vector<1x32xf32>
    %104 = vector.broadcast %103 : vector<1x32xf32> to vector<8x32xf32>
    %105 = arith.addf %102, %104 : vector<8x32xf32>
    %106 = arith.addf %105, %1 : vector<8x32xf32>
    %c0_38 = arith.constant 0 : index
    %c0_39 = arith.constant 0 : index
    %107 = vector.load %arg6[%c0_38, %c0_39] : memref<1x32xf32, #tpu.memory_space<vmem>>, vector<1x32xf32>
    %c0_40 = arith.constant 0 : index
    %c0_41 = arith.constant 0 : index
    %108 = vector.load %arg7[%c0_40, %c0_41] : memref<1x32xf32, #tpu.memory_space<vmem>>, vector<1x32xf32>
    %cst_42 = arith.constant dense<0.000000e+00> : vector<8xf32>
    %109 = vector.multi_reduction <add>, %106, %cst_42 [1] : vector<8x32xf32> to vector<8xf32>
    %110 = vector.shape_cast %109 : vector<8xf32> to vector<8x1xf32>
    %cst_43 = arith.constant 3.200000e+01 : f32
    %111 = vector.broadcast %cst_43 : f32 to vector<8x1xf32>
    %112 = arith.divf %110, %111 : vector<8x1xf32>
    %113 = vector.broadcast %112 : vector<8x1xf32> to vector<8x32xf32>
    %114 = arith.subf %106, %113 : vector<8x32xf32>
    %115 = vector.broadcast %112 : vector<8x1xf32> to vector<8x32xf32>
    %116 = arith.subf %106, %115 : vector<8x32xf32>
    %117 = arith.mulf %114, %116 : vector<8x32xf32>
    %cst_44 = arith.constant dense<0.000000e+00> : vector<8xf32>
    %118 = vector.multi_reduction <add>, %117, %cst_44 [1] : vector<8x32xf32> to vector<8xf32>
    %119 = vector.shape_cast %118 : vector<8xf32> to vector<8x1xf32>
    %cst_45 = arith.constant 3.200000e+01 : f32
    %120 = vector.broadcast %cst_45 : f32 to vector<8x1xf32>
    %121 = arith.divf %119, %120 : vector<8x1xf32>
    %122 = vector.broadcast %112 : vector<8x1xf32> to vector<8x32xf32>
    %123 = arith.subf %106, %122 : vector<8x32xf32>
    %cst_46 = arith.constant 9.99999974E-6 : f32
    %124 = vector.broadcast %cst_46 : f32 to vector<8x1xf32>
    %125 = arith.addf %121, %124 : vector<8x1xf32>
    %126 = math.rsqrt %125 : vector<8x1xf32>
    %127 = vector.broadcast %126 : vector<8x1xf32> to vector<8x32xf32>
    %128 = arith.mulf %123, %127 : vector<8x32xf32>
    %129 = vector.broadcast %107 : vector<1x32xf32> to vector<8x32xf32>
    %130 = arith.mulf %128, %129 : vector<8x32xf32>
    %131 = vector.broadcast %108 : vector<1x32xf32> to vector<8x32xf32>
    %132 = arith.addf %130, %131 : vector<8x32xf32>
    %c0_47 = arith.constant 0 : index
    %c0_48 = arith.constant 0 : index
    %c0_49 = arith.constant 0 : index
    %133 = vector.load %arg8[%c0_47, %c0_48, %c0_49] : memref<1x8x32xf32, #tpu.memory_space<vmem>>, vector<1x8x32xf32>
    %134 = vector.shape_cast %133 : vector<1x8x32xf32> to vector<8x32xf32>
    %135 = vector.shape_cast %132 : vector<8x32xf32> to vector<1x8x32xf32>
    tpu.vector_store %arg8[%c0_47, %c0_48, %c0_49], %135 {strides = array<i32>} : memref<1x8x32xf32, #tpu.memory_space<vmem>>, vector<1x8x32xf32>,
    return
  }
  func.func @transform_0(%arg0: i32) -> (i32, i32, i32) {
    %c0_i32 = arith.constant 0 : i32
    %c0_i32_0 = arith.constant 0 : i32
    %c0_i32_1 = arith.constant 0 : i32
    return %arg0, %c0_i32, %c0_i32_0 : i32, i32, i32
  }
  func.func @transform_1(%arg0: i32) -> (i32, i32) {
    %c0_i32 = arith.constant 0 : i32
    %c0_i32_0 = arith.constant 0 : i32
    %c0_i32_1 = arith.constant 0 : i32
    return %c0_i32, %c0_i32_0 : i32, i32
  }
  func.func @transform_2(%arg0: i32) -> (i32, i32) {
    %c0_i32 = arith.constant 0 : i32
    %c0_i32_0 = arith.constant 0 : i32
    %c0_i32_1 = arith.constant 0 : i32
    return %c0_i32, %c0_i32_0 : i32, i32
  }
  func.func @transform_3(%arg0: i32) -> (i32, i32) {
    %c0_i32 = arith.constant 0 : i32
    %c0_i32_0 = arith.constant 0 : i32
    %c0_i32_1 = arith.constant 0 : i32
    return %c0_i32, %c0_i32_0 : i32, i32
  }
  func.func @transform_4(%arg0: i32) -> (i32, i32) {
    %c0_i32 = arith.constant 0 : i32
    %c0_i32_0 = arith.constant 0 : i32
    %c0_i32_1 = arith.constant 0 : i32
    return %c0_i32, %c0_i32_0 : i32, i32
  }
  func.func @transform_5(%arg0: i32) -> (i32, i32) {
    %c0_i32 = arith.constant 0 : i32
    %c0_i32_0 = arith.constant 0 : i32
    %c0_i32_1 = arith.constant 0 : i32
    return %c0_i32, %c0_i32_0 : i32, i32
  }
  func.func @transform_6(%arg0: i32) -> (i32, i32) {
    %c0_i32 = arith.constant 0 : i32
    %c0_i32_0 = arith.constant 0 : i32
    %c0_i32_1 = arith.constant 0 : i32
    return %c0_i32, %c0_i32_0 : i32, i32
  }
  func.func @transform_7(%arg0: i32) -> (i32, i32, i32) {
    %c0_i32 = arith.constant 0 : i32
    %c0_i32_0 = arith.constant 0 : i32
    %c0_i32_1 = arith.constant 0 : i32
    return %arg0, %c0_i32, %c0_i32_0 : i32, i32, i32
  }
}

</mosaic_0001>

<llo_original>
// kernel: tpu_custom_call.1
$region0: #{tpu_custom_call.1}
  #allocation0 [shape = 'u32[]', space=smem, size = 0x4, offset = 0x4, fixed_abs, tag = 'smem constant byte address 0x4 - core index']
  #allocation1 [shape = 'u32[144,128]{1,0:T(1,128)}', space=vmem, size = 0x12000, scoped, tag = 'internal scratch']
  #allocation2 [shape = 'f32[8,32]{1,0:T(8,128)}', space=vmem, size = 0x1000, scoped, tag = 'scratch operand']
  %s0 = inlined_call_operand.hbm [shape: f32[2,8,32], index: 0, kind: input, shape index: {}]
  %s1 = inlined_call_operand.hbm [shape: bf16[32,96], index: 1, kind: input, shape index: {}]
  %s2 = inlined_call_operand.hbm [shape: f32[1,96], index: 2, kind: input, shape index: {}]
  %s3 = inlined_call_operand.hbm [shape: bf16[32,32], index: 3, kind: input, shape index: {}]
  %s4 = inlined_call_operand.hbm [shape: f32[1,32], index: 4, kind: input, shape index: {}]
  %s5 = inlined_call_operand.hbm [shape: f32[1,32], index: 5, kind: input, shape index: {}]
  %s6 = inlined_call_operand.hbm [shape: f32[1,32], index: 6, kind: input, shape index: {}]
  %s7 = inlined_call_operand.hbm [shape: f32[2,8,32], index: 7, kind: output, shape index: {}]
  %s8 = sld [smem:[#allocation0]]
  $region89: #{tpu_custom_call.1} parent=0
    _
  %s10 = ssub.s32 1, %s8
  %s11 = scalar_select 0, %s10, %s8
  $region1: #{tpu_custom_call.1} parent=0
    #allocation3 [shape = 'u8[8192]{0}', space=vmem, size = 0x2000, scoped, tag = 'input window, operand 0']
    #allocation4 [shape = 's32[2]{0}', space=sflag, size = 0x8, scoped, tag = 'scoped memory for tpu_custom_call.1']
    #allocation5 [shape = 's32[2]{0}', space=sflag, size = 0x8, scoped, tag = 'scoped memory for tpu_custom_call.1']
    #allocation6 [shape = 'u8[8192]{0}', space=vmem, size = 0x2000, scoped, tag = 'input window, operand 1, single buffered']
    #allocation7 [shape = 's32[1]{0}', space=sflag, size = 0x4, scoped, tag = 'scoped memory for tpu_custom_call.1']
    #allocation8 [shape = 'u8[512]{0}', space=vmem, size = 0x400, scoped, tag = 'input window, operand 2, single buffered']
    #allocation9 [shape = 'u8[8192]{0}', space=vmem, size = 0x2000, scoped, tag = 'input window, operand 3, single buffered']
    #allocation10 [shape = 's32[1]{0}', space=sflag, size = 0x4, scoped, tag = 'scoped memory for tpu_custom_call.1']
    #allocation11 [shape = 'u8[512]{0}', space=vmem, size = 0x400, scoped, tag = 'input window, operand 4, single buffered']
    #allocation12 [shape = 'u8[512]{0}', space=vmem, size = 0x400, scoped, tag = 'input window, operand 5, single buffered']
    #allocation13 [shape = 's32[1]{0}', space=sflag, size = 0x4, scoped, tag = 'scoped memory for tpu_custom_call.1']
    #allocation14 [shape = 'u8[512]{0}', space=vmem, size = 0x400, scoped, tag = 'input window, operand 6, single buffered']
    #allocation15 [shape = 'u8[8192]{0}', space=vmem, size = 0x2000, scoped, tag = 'output window, operand 0']
    %12 = vsyncpa [#allocation4], 0
    %s13 = scalar_lea.sflag [#allocation4], 1
    %14 = vsyncpa %s13, 0
    %15 = vsyncpa [#allocation7], 0
    %16 = vsyncpa [#allocation10], 0
    %17 = vsyncpa [#allocation13], 0
    %18 = vsyncpa [#allocation5], 0
    %s19 = scalar_lea.sflag [#allocation5], 1
    %20 = vsyncpa %s19, 0
    loop: start=0, step=1, limit=4
    $region2: #{tpu_custom_call.1} parent=1 // loop_pre_header
      _
    $region3: #{tpu_custom_call.1} parent=1 // loop_header
      %s22 = sphi 0, %s26
      %p23 = scmp.ge.s32.totalorder %s22, 4
      %s32 = sphi 0, %s34
      %s35 = sphi 0, %s32
      %s36 = sphi 0, %s35
      %s52 = sphi 0, %s36
      %s56 = sphi 0, %s56
      %s58 = sphi 0, %s56
      %s59 = sphi 0, %s58
      %s73 = sphi 0, %s59
      %s77 = sphi 0, %s77
      %s79 = sphi 0, %s77
      %s80 = sphi 0, %s79
      %s94 = sphi 0, %s80
      %s98 = sphi 0, %s98
      %s100 = sphi 0, %s98
      %s101 = sphi 0, %s100
      %s115 = sphi 0, %s101
      %s119 = sphi 0, %s119
      %s121 = sphi 0, %s119
      %s122 = sphi 0, %s121
      %s136 = sphi 0, %s122
      %s140 = sphi 0, %s140
      %s142 = sphi 0, %s140
      %s143 = sphi 0, %s142
      %s157 = sphi 0, %s143
      %s161 = sphi 0, %s161
      %s163 = sphi 0, %s161
      %s164 = sphi 0, %s163
      %s178 = sphi 0, %s164
      %s184 = sphi 0, %s186
      %s187 = sphi 0, %s184
      %s188 = sphi 0, %s187
      %s204 = sphi 0, %s188
    $region4: #{tpu_custom_call.1} parent=1 // loop_header_branch
      %25 = sbr.rel (%p23) target = $region8
    $region5: #{tpu_custom_call.1} parent=1 // loop_body
      %s27 = ssub.s32 %s22, 1
      %s28 = ssub.s32 %s22, 2
      %s29 = sadd.s32 %s22, 1
      %s30 = ssub.s32 %s22, %s29
      %p31 = scmp.eq.s32.totalorder %s30, 0
      %s33 = sadd.s32 %s32, 1
      %s34 = scalar_select %p31, %s32, %s33
      %p37 = pneg %p31
      %p38 = scmp.eq.s32.totalorder %s22, 1
      %p39 = por %p37, %p38
      %p40 = scmp.ne.s32.totalorder %s32, %s35
      %p41 = scmp.eq.s32.totalorder %s22, 0
      %p42 = por %p40, %p41
      %p43 = scmp.ne.s32.totalorder %s32, %s35
      %p44 = scmp.eq.s32.totalorder %s27, 1
      %p45 = por %p43, %p44
      %p46 = scmp.ne.s32.totalorder %s35, %s36
      %p47 = scmp.eq.s32.totalorder %s27, 0
      %p48 = por %p46, %p47
      %p49 = scmp.ne.s32.totalorder %s35, %s36
      %p50 = scmp.eq.s32.totalorder %s28, 1
      %p51 = por %p49, %p50
      %p53 = scmp.ne.s32.totalorder %s36, %s52
      %p54 = scmp.eq.s32.totalorder %s28, 0
      %p55 = por %p53, %p54
      %s57 = sadd.s32 %s56, 1
      %p60 = scmp.eq.s32.totalorder %s22, 1
      %p61 = scmp.ne.s32.totalorder %s56, %s58
      %p62 = scmp.eq.s32.totalorder %s22, 0
      %p63 = por %p61, %p62
      %p64 = scmp.ne.s32.totalorder %s56, %s58
      %p65 = scmp.eq.s32.totalorder %s27, 1
      %p66 = por %p64, %p65
      %p67 = scmp.ne.s32.totalorder %s58, %s59
      %p68 = scmp.eq.s32.totalorder %s27, 0
      %p69 = por %p67, %p68
      %p70 = scmp.ne.s32.totalorder %s58, %s59
      %p71 = scmp.eq.s32.totalorder %s28, 1
      %p72 = por %p70, %p71
      %p74 = scmp.ne.s32.totalorder %s59, %s73
      %p75 = scmp.eq.s32.totalorder %s28, 0
      %p76 = por %p74, %p75
      %s78 = sadd.s32 %s77, 1
      %p81 = scmp.eq.s32.totalorder %s22, 1
      %p82 = scmp.ne.s32.totalorder %s77, %s79
      %p83 = scmp.eq.s32.totalorder %s22, 0
      %p84 = por %p82, %p83
      %p85 = scmp.ne.s32.totalorder %s77, %s79
      %p86 = scmp.eq.s32.totalorder %s27, 1
      %p87 = por %p85, %p86
      %p88 = scmp.ne.s32.totalorder %s79, %s80
      %p89 = scmp.eq.s32.totalorder %s27, 0
      %p90 = por %p88, %p89
      %p91 = scmp.ne.s32.totalorder %s79, %s80
      %p92 = scmp.eq.s32.totalorder %s28, 1
      %p93 = por %p91, %p92
      %p95 = scmp.ne.s32.totalorder %s80, %s94
      %p96 = scmp.eq.s32.totalorder %s28, 0
      %p97 = por %p95, %p96
      %s99 = sadd.s32 %s98, 1
      %p102 = scmp.eq.s32.totalorder %s22, 1
      %p103 = scmp.ne.s32.totalorder %s98, %s100
      %p104 = scmp.eq.s32.totalorder %s22, 0
      %p105 = por %p103, %p104
      %p106 = scmp.ne.s32.totalorder %s98, %s100
      %p107 = scmp.eq.s32.totalorder %s27, 1
      %p108 = por %p106, %p107
      %p109 = scmp.ne.s32.totalorder %s100, %s101
      %p110 = scmp.eq.s32.totalorder %s27, 0
      %p111 = por %p109, %p110
      %p112 = scmp.ne.s32.totalorder %s100, %s101
      %p113 = scmp.eq.s32.totalorder %s28, 1
      %p114 = por %p112, %p113
      %p116 = scmp.ne.s32.totalorder %s101, %s115
      %p117 = scmp.eq.s32.totalorder %s28, 0
      %p118 = por %p116, %p117
      %s120 = sadd.s32 %s119, 1
      %p123 = scmp.eq.s32.totalorder %s22, 1
      %p124 = scmp.ne.s32.totalorder %s119, %s121
      %p125 = scmp.eq.s32.totalorder %s22, 0
      %p126 = por %p124, %p125
      %p127 = scmp.ne.s32.totalorder %s119, %s121
      %p128 = scmp.eq.s32.totalorder %s27, 1
      %p129 = por %p127, %p128
      %p130 = scmp.ne.s32.totalorder %s121, %s122
      %p131 = scmp.eq.s32.totalorder %s27, 0
      %p132 = por %p130, %p131
      %p133 = scmp.ne.s32.totalorder %s121, %s122
      %p134 = scmp.eq.s32.totalorder %s28, 1
      %p135 = por %p133, %p134
      %p137 = scmp.ne.s32.totalorder %s122, %s136
      %p138 = scmp.eq.s32.totalorder %s28, 0
      %p139 = por %p137, %p138
      %s141 = sadd.s32 %s140, 1
      %p144 = scmp.eq.s32.totalorder %s22, 1
      %p145 = scmp.ne.s32.totalorder %s140, %s142
      %p146 = scmp.eq.s32.totalorder %s22, 0
      %p147 = por %p145, %p146
      %p148 = scmp.ne.s32.totalorder %s140, %s142
      %p149 = scmp.eq.s32.totalorder %s27, 1
      %p150 = por %p148, %p149
      %p151 = scmp.ne.s32.totalorder %s142, %s143
      %p152 = scmp.eq.s32.totalorder %s27, 0
      %p153 = por %p151, %p152
      %p154 = scmp.ne.s32.totalorder %s142, %s143
      %p155 = scmp.eq.s32.totalorder %s28, 1
      %p156 = por %p154, %p155
      %p158 = scmp.ne.s32.totalorder %s143, %s157
      %p159 = scmp.eq.s32.totalorder %s28, 0
      %p160 = por %p158, %p159
      %s162 = sadd.s32 %s161, 1
      %p165 = scmp.eq.s32.totalorder %s22, 1
      %p166 = scmp.ne.s32.totalorder %s161, %s163
      %p167 = scmp.eq.s32.totalorder %s22, 0
      %p168 = por %p166, %p167
      %p169 = scmp.ne.s32.totalorder %s161, %s163
      %p170 = scmp.eq.s32.totalorder %s27, 1
      %p171 = por %p169, %p170
      %p172 = scmp.ne.s32.totalorder %s163, %s164
      %p173 = scmp.eq.s32.totalorder %s27, 0
      %p174 = por %p172, %p173
      %p175 = scmp.ne.s32.totalorder %s163, %s164
      %p176 = scmp.eq.s32.totalorder %s28, 1
      %p177 = por %p175, %p176
      %p179 = scmp.ne.s32.totalorder %s164, %s178
      %p180 = scmp.eq.s32.totalorder %s28, 0
      %p181 = por %p179, %p180
      %s182 = ssub.s32 %s22, %s29
      %p183 = scmp.eq.s32.totalorder %s182, 0
      %s185 = sadd.s32 %s184, 1
      %s186 = scalar_select %p183, %s184, %s185
      %p189 = pneg %p183
      %p190 = scmp.eq.s32.totalorder %s22, 1
      %p191 = por %p189, %p190
      %p192 = scmp.ne.s32.totalorder %s184, %s187
      %p193 = scmp.eq.s32.totalorder %s22, 0
      %p194 = por %p192, %p193
      %p195 = scmp.ne.s32.totalorder %s184, %s187
      %p196 = scmp.eq.s32.totalorder %s27, 1
      %p197 = por %p195, %p196
      %p198 = scmp.ne.s32.totalorder %s187, %s188
      %p199 = scmp.eq.s32.totalorder %s27, 0
      %p200 = por %p198, %p199
      %p201 = scmp.ne.s32.totalorder %s187, %s188
      %p202 = scmp.eq.s32.totalorder %s28, 1
      %p203 = por %p201, %p202
      %p205 = scmp.ne.s32.totalorder %s188, %s204
      %p206 = scmp.eq.s32.totalorder %s28, 0
      %p207 = por %p205, %p206
      %p208 = scmp.le.s32.totalorder 1, %s22
      %p209 = scmp.lt.s32.totalorder %s22, 3
      %p210 = pnand %p208, %p209
      %p211 = pneg %p210
      // Predicated region
      $region9: #{tpu_custom_call.1} parent=5 // pred_check
        _
      $region10: #{tpu_custom_call.1} parent=5 // pred_check_branch
        %213 = sbr.rel (%p210) target = $region12
      $region11: #{tpu_custom_call.1} parent=5 // pred_region
        %s214 = ssub.s32 %s22, 1
        // Predicated region
        $region13: #{tpu_custom_call.1} parent=11 // pred_check
          %p215 = pneg %p69
        $region14: #{tpu_custom_call.1} parent=11 // pred_check_branch
          %217 = sbr.rel (%p215) target = $region16
        $region15: #{tpu_custom_call.1} parent=11 // pred_region
          %s219 = ssub.s32 256, 256
          %220 = vsyncadd [#allocation7], %s219
          %s221 = sshll.u32 [#allocation6], 4
          %s222 = int_to_ptr.vmem [resolvable:$true] %s221
          %227 = dma.hbm_to_vmem [thread:$0]  %s1, 256, %s222, [#allocation7], 64, 64, 4
        $region16: #{tpu_custom_call.1} parent=11 // pred_fallthru
          _
        // Predicated region
        $region17: #{tpu_custom_call.1} parent=11 // pred_check
          %p228 = pneg %p90
        $region18: #{tpu_custom_call.1} parent=11 // pred_check_branch
          %230 = sbr.rel (%p228) target = $region20
        $region19: #{tpu_custom_call.1} parent=11 // pred_region
          %s232 = ssub.s32 16, 16
          %233 = vsyncadd [#allocation7], %s232
          %s235 = sshll.u32 [#allocation8], 4
          %s236 = int_to_ptr.vmem [resolvable:$true] %s235
          %238 = dma.hbm_to_vmem [thread:$0]  %s2, 16, %s236, [#allocation7]
        $region20: #{tpu_custom_call.1} parent=11 // pred_fallthru
          _
        // Predicated region
        $region21: #{tpu_custom_call.1} parent=11 // pred_check
          %p239 = pneg %p111
        $region22: #{tpu_custom_call.1} parent=11 // pred_check_branch
          %241 = sbr.rel (%p239) target = $region24
        $region23: #{tpu_custom_call.1} parent=11 // pred_region
          %s243 = ssub.s32 256, 256
          %244 = vsyncadd [#allocation10], %s243
          %s245 = sshll.u32 [#allocation9], 4
          %s246 = int_to_ptr.vmem [resolvable:$true] %s245
          %251 = dma.hbm_to_vmem [thread:$0]  %s3, 256, %s246, [#allocation10], 64, 64, 4
        $region24: #{tpu_custom_call.1} parent=11 // pred_fallthru
          _
        // Predicated region
        $region25: #{tpu_custom_call.1} parent=11 // pred_check
          %p252 = pneg %p132
        $region26: #{tpu_custom_call.1} parent=11 // pred_check_branch
          %254 = sbr.rel (%p252) target = $region28
        $region27: #{tpu_custom_call.1} parent=11 // pred_region
          %s256 = ssub.s32 16, 16
          %257 = vsyncadd [#allocation10], %s256
          %s259 = sshll.u32 [#allocation11], 4
          %s260 = int_to_ptr.vmem [resolvable:$true] %s259
          %262 = dma.hbm_to_vmem [thread:$0]  %s4, 16, %s260, [#allocation10]
        $region28: #{tpu_custom_call.1} parent=11 // pred_fallthru
          _
        // Predicated region
        $region29: #{tpu_custom_call.1} parent=11 // pred_check
          %p263 = pneg %p153
        $region30: #{tpu_custom_call.1} parent=11 // pred_check_branch
          %265 = sbr.rel (%p263) target = $region32
        $region31: #{tpu_custom_call.1} parent=11 // pred_region
          %s267 = ssub.s32 16, 16
          %268 = vsyncadd [#allocation13], %s267
          %s270 = sshll.u32 [#allocation12], 4
          %s271 = int_to_ptr.vmem [resolvable:$true] %s270
          %273 = dma.hbm_to_vmem [thread:$0]  %s5, 16, %s271, [#allocation13]
        $region32: #{tpu_custom_call.1} parent=11 // pred_fallthru
          _
        // Predicated region
        $region33: #{tpu_custom_call.1} parent=11 // pred_check
          %p274 = pneg %p174
        $region34: #{tpu_custom_call.1} parent=11 // pred_check_branch
          %276 = sbr.rel (%p274) target = $region36
        $region35: #{tpu_custom_call.1} parent=11 // pred_region
          %s278 = ssub.s32 16, 16
          %279 = vsyncadd [#allocation13], %s278
          %s281 = sshll.u32 [#allocation14], 4
          %s282 = int_to_ptr.vmem [resolvable:$true] %s281
          %284 = dma.hbm_to_vmem [thread:$0]  %s6, 16, %s282, [#allocation13]
        $region36: #{tpu_custom_call.1} parent=11 // pred_fallthru
          _
      $region12: #{tpu_custom_call.1} parent=5 // pred_fallthru
        _
      %p285 = scmp.lt.s32.totalorder %s22, 2
      // Predicated region
      $region37: #{tpu_custom_call.1} parent=5 // pred_check
        %p286 = pneg %p285
      $region38: #{tpu_custom_call.1} parent=5 // pred_check_branch
        %288 = sbr.rel (%p286) target = $region40
      $region39: #{tpu_custom_call.1} parent=5 // pred_region
        // Predicated region
        $region41: #{tpu_custom_call.1} parent=39 // pred_check
          %p289 = pneg %p42
        $region42: #{tpu_custom_call.1} parent=39 // pred_check_branch
          %291 = sbr.rel (%p289) target = $region44
        $region43: #{tpu_custom_call.1} parent=39 // pred_region
          %s292 = sand.u32 %s32, 1
          %s293 = scalar_lea.sflag [#allocation4], %s292
          %s294 = sand.u32 %s32, 1
          %s295 = smul.addr %s294, 8
          %s296 = scalar_lea.vmem [#allocation3], %s295
          %s298 = ssub.s32 128, 128
          %299 = vsyncadd %s293, %s298
          %s300 = smul.addr %s22, 128
          %s301 = scalar_lea.hbm %s0, %s300
          %s303 = sshll.u32 %s296, 4
          %s304 = int_to_ptr.vmem [resolvable:$true] %s303
          %306 = dma.hbm_to_vmem [thread:$0]  %s301, 128, %s304, %s293
        $region44: #{tpu_custom_call.1} parent=39 // pred_fallthru
          _
      $region40: #{tpu_custom_call.1} parent=5 // pred_fallthru
        _
      %p307 = scmp.le.s32.totalorder 1, %s22
      %p308 = scmp.lt.s32.totalorder %s22, 3
      %p309 = pnand %p307, %p308
      %p310 = pneg %p309
      // Predicated region
      $region45: #{tpu_custom_call.1} parent=5 // pred_check
        _
      $region46: #{tpu_custom_call.1} parent=5 // pred_check_branch
        %312 = sbr.rel (%p309) target = $region48
      $region47: #{tpu_custom_call.1} parent=5 // pred_region
        %s313 = ssub.s32 %s22, 1
        %s314 = sand.u32 %s35, 1
        %s315 = scalar_lea.sflag [#allocation4], %s314
        %s316 = sand.u32 %s35, 1
        %s317 = smul.addr %s316, 8
        %s318 = scalar_lea.vmem [#allocation3], %s317
        // Predicated region
        $region49: #{tpu_custom_call.1} parent=47 // pred_check
          %p319 = pneg %p48
        $region50: #{tpu_custom_call.1} parent=47 // pred_check_branch
          %321 = sbr.rel (%p319) target = $region52
        $region51: #{tpu_custom_call.1} parent=47 // pred_region
          %322 = dma.done %s315, 128
        $region52: #{tpu_custom_call.1} parent=47 // pred_fallthru
          _
        // Predicated region
        $region53: #{tpu_custom_call.1} parent=47 // pred_check
          %p323 = pneg %p69
        $region54: #{tpu_custom_call.1} parent=47 // pred_check_branch
          %325 = sbr.rel (%p323) target = $region56
        $region55: #{tpu_custom_call.1} parent=47 // pred_region
          %326 = dma.done [#allocation7], 256
        $region56: #{tpu_custom_call.1} parent=47 // pred_fallthru
          _
        // Predicated region
        $region57: #{tpu_custom_call.1} parent=47 // pred_check
          %p327 = pneg %p90
        $region58: #{tpu_custom_call.1} parent=47 // pred_check_branch
          %329 = sbr.rel (%p327) target = $region60
        $region59: #{tpu_custom_call.1} parent=47 // pred_region
          %330 = dma.done [#allocation7], 16
        $region60: #{tpu_custom_call.1} parent=47 // pred_fallthru
          _
        // Predicated region
        $region61: #{tpu_custom_call.1} parent=47 // pred_check
          %p331 = pneg %p111
        $region62: #{tpu_custom_call.1} parent=47 // pred_check_branch
          %333 = sbr.rel (%p331) target = $region64
        $region63: #{tpu_custom_call.1} parent=47 // pred_region
          %334 = dma.done [#allocation10], 256
        $region64: #{tpu_custom_call.1} parent=47 // pred_fallthru
          _
        // Predicated region
        $region65: #{tpu_custom_call.1} parent=47 // pred_check
          %p335 = pneg %p132
        $region66: #{tpu_custom_call.1} parent=47 // pred_check_branch
          %337 = sbr.rel (%p335) target = $region68
        $region67: #{tpu_custom_call.1} parent=47 // pred_region
          %338 = dma.done [#allocation10], 16
        $region68: #{tpu_custom_call.1} parent=47 // pred_fallthru
          _
        // Predicated region
        $region69: #{tpu_custom_call.1} parent=47 // pred_check
          %p339 = pneg %p153
        $region70: #{tpu_custom_call.1} parent=47 // pred_check_branch
          %341 = sbr.rel (%p339) target = $region72
        $region71: #{tpu_custom_call.1} parent=47 // pred_region
          %342 = dma.done [#allocation13], 16
        $region72: #{tpu_custom_call.1} parent=47 // pred_fallthru
          _
        // Predicated region
        $region73: #{tpu_custom_call.1} parent=47 // pred_check
          %p343 = pneg %p174
        $region74: #{tpu_custom_call.1} parent=47 // pred_check_branch
          %345 = sbr.rel (%p343) target = $region76
        $region75: #{tpu_custom_call.1} parent=47 // pred_region
          %346 = dma.done [#allocation13], 16
        $region76: #{tpu_custom_call.1} parent=47 // pred_fallthru
          _
        %s347 = sand.u32 %s35, 1
        %s348 = scalar_lea.sflag [#allocation4], %s347
        %s349 = sand.u32 %s35, 1
        %s350 = smul.addr %s349, 8
        %s351 = scalar_lea.vmem [#allocation3], %s350
        %p352 = pneg %p48
        %p353 = pneg %p45
        %p354 = pneg %p69
        %p355 = pneg %p66
        %p356 = pneg %p90
        %p357 = pneg %p87
        %p358 = pneg %p111
        %p359 = pneg %p108
        %p360 = pneg %p132
        %p361 = pneg %p129
        %p362 = pneg %p153
        %p363 = pneg %p150
        %p364 = pneg %p174
        %p365 = pneg %p171
        %p366 = pneg %p200
        %p367 = pneg %p197
        %s368 = sand.u32 %s187, 1
        %s369 = scalar_lea.sflag [#allocation5], %s368
        %s370 = sand.u32 %s187, 1
        %s371 = smul.addr %s370, 8
        %s372 = scalar_lea.vmem [#allocation15], %s371
        %v374 = vld [vmem:[%s318] sm:$0xff]
        %v375 = vld [vmem:[#allocation6] sm:$0xf]
        %v376 = vld [vmem:[#allocation6 + $0x4] sm:$0xf]
        %v377 = vld [vmem:[#allocation6 + $0x8] sm:$0xf]
        %v378 = vld [vmem:[#allocation6 + $0xc] sm:$0xf]
        %v379 = vpack.c.bf16 %v374, %v374
        %v380 = vld [vmem:[#allocation8] sm:$0x1]
        %v382 = vlaneseq
        %v383 = vshrl.u32 %v382, 7
        %v384 = vsub.s32 0, %v383
        %v385 = vrot.slane %v380, %v384
        %v391 = vunpack.c.l.b16 %v375
        %v392 = vunpack.c.l.b16 %v376
        %v393 = vunpack.c.l.b16 %v377
        %v394 = vunpack.c.l.b16 %v378
        %v395 = vpack.c.b16 %v392, %v391
        %v396 = vpack.c.b16 %v394, %v393
        %vm399 = vcmask 261120
        %v401 = vsel %vm399, %v379, 0
        %403 = vmatprep.subr.bf16.mxu0 0
        %404 = vmatpush1.bf16.msra.mxu0 %v395
        %405 = vmatprep.subr.bf16.mxu0 0
        %406 = vmatpush1.bf16.msra.mxu0 %v396
        %407 = vmatprep.subr.bf16.mxu0 0
        %408 = vmatpush1.bf16.msra.mxu0 0
        %409 = vmatprep.subr.bf16.mxu0 0
        %410 = vmatpush1.bf16.msra.mxu0 0
        %411 = vmatprep.subr.bf16.mxu0 0
        %412 = vmatpush1.bf16.msra.mxu0 0
        %413 = vmatprep.subr.bf16.mxu0 0
        %414 = vmatpush1.bf16.msra.mxu0 0
        %415 = vmatprep.subr.bf16.mxu0 0
        %416 = vmatpush1.bf16.msra.mxu0 0
        %417 = vmatprep.subr.bf16.mxu0 0
        %418 = vmatpush1.bf16.msra.mxu0 0
        %419 = vmatprep.subr.bf16.mxu0 0
        %420 = vmatpush1.bf16.msra.mxu0 0
        %421 = vmatprep.subr.bf16.mxu0 0
        %422 = vmatpush1.bf16.msra.mxu0 0
        %423 = vmatprep.subr.bf16.mxu0 0
        %424 = vmatpush1.bf16.msra.mxu0 0
        %425 = vmatprep.subr.bf16.mxu0 0
        %426 = vmatpush1.bf16.msra.mxu0 0
        %427 = vmatprep.subr.bf16.mxu0 0
        %428 = vmatpush1.bf16.msra.mxu0 0
        %429 = vmatprep.subr.bf16.mxu0 0
        %430 = vmatpush1.bf16.msra.mxu0 0
        %431 = vmatprep.subr.bf16.mxu0 0
        %432 = vmatpush1.bf16.msra.mxu0 0
        %433 = vmatprep.subr.bf16.mxu0 0
        %434 = vmatpush1.bf16.msra.mxu0 0
        %435 = vmatprep.mubr.bf16.mxu0 0
        %436 = vmatmul.mubr.bf16.gmra.mrb[0].mxu0 %v401
        %v437 = vpop.f32.mrb[0].mxu0
        %v438 = vadd.f32 %v385, %v437
        %v439 = vpop.f32.mrb[0].mxu0
        %v440 = vpop.f32.mrb[0].mxu0
        %v441 = vpop.f32.mrb[0].mxu0
        %442 = vdwg.mxu0
        %v443 = vpack.c.bf16 %v438, %v438
        %445 = vrot.lane.b32.xlu0 %v443, 96
        %v446 = vpop.permute.xlu0 %445
        %vm447 = vcmask 64512
        %v449 = vsel %vm447, %v443, 0
        %v452 = vsel %vm447, %v446, 0
        %454 = vmatprep.subr.bf16.mxu0 0
        %455 = vmatpush1.bf16.xpose.msra.mxu0 %v452
        %456 = vmatprep.subr.bf16.mxu0 0
        %457 = vmatpush1.bf16.xpose.msra.mxu0 0
        %458 = vmatprep.subr.bf16.mxu0 0
        %459 = vmatpush1.bf16.xpose.msra.mxu0 0
        %460 = vmatprep.subr.bf16.mxu0 0
        %461 = vmatpush1.bf16.xpose.msra.mxu0 0
        %462 = vmatprep.subr.bf16.mxu0 0
        %463 = vmatpush1.bf16.xpose.msra.mxu0 0
        %464 = vmatprep.subr.bf16.mxu0 0
        %465 = vmatpush1.bf16.xpose.msra.mxu0 0
        %466 = vmatprep.subr.bf16.mxu0 0
        %467 = vmatpush1.bf16.xpose.msra.mxu0 0
        %468 = vmatprep.subr.bf16.mxu0 0
        %469 = vmatpush1.bf16.xpose.msra.mxu0 0
        %470 = vmatprep.subr.bf16.mxu0 0
        %471 = vmatpush1.bf16.xpose.msra.mxu0 0
        %472 = vmatprep.subr.bf16.mxu0 0
        %473 = vmatpush1.bf16.xpose.msra.mxu0 0
        %474 = vmatprep.subr.bf16.mxu0 0
        %475 = vmatpush1.bf16.xpose.msra.mxu0 0
        %476 = vmatprep.subr.bf16.mxu0 0
        %477 = vmatpush1.bf16.xpose.msra.mxu0 0
        %478 = vmatprep.subr.bf16.mxu0 0
        %479 = vmatpush1.bf16.xpose.msra.mxu0 0
        %480 = vmatprep.subr.bf16.mxu0 0
        %481 = vmatpush1.bf16.xpose.msra.mxu0 0
        %482 = vmatprep.subr.bf16.mxu0 0
        %483 = vmatpush1.bf16.xpose.msra.mxu0 0
        %484 = vmatprep.subr.bf16.mxu0 0
        %485 = vmatpush1.bf16.xpose.msra.mxu0 0
        %486 = vmatprep.mubr.bf16.mxu0 0
        %487 = vmatmul.mubr.bf16.gmra.mrb[0].mxu0 %v449
        %v488 = vpop.f32.mrb[0].mxu0
        %v489 = vadd.f32 0.0, %v488
        %v490 = vpop.f32.mrb[0].mxu0
        %v491 = vpop.f32.mrb[0].mxu0
        %v492 = vpop.f32.mrb[0].mxu0
        %493 = vdwg.mxu0
        %v494 = vmul.f32 %v489, 0.35355338
        %v495 = vsel %vm447, %v494, -inf
        %496 = vmax.xlane.f32.xlu0 %v495
        %v497 = vpop.xlane.xlu0 %496
        %v498 = vsub.f32 %v494, %v497
        %v499 = vmul.f32 %v498, 1.442695
        %v500 = vpow.pop %v499
        %v501 = vsel %vm447, %v500, 0.0
        %502 = vadd.xlane.f32.xlu0 %v501
        %v503 = vpop.xlane.xlu0 %502
        %v504 = vrcp.pop %v503
        %v505 = vmul.f32 %v500, %v504
        %v506 = vpack.c.bf16 %v505, %v505
        %507 = vrot.lane.b32.xlu0 %v443, 64
        %v508 = vpop.permute.xlu0 %507
        %v510 = vsel %vm447, %v506, 0
        %vm512 = vcmask 1043456
        %v514 = vsel %vm512, %v508, 0
        %516 = vmatprep.subr.bf16.mxu0 0
        %517 = vmatpush1.bf16.msra.mxu0 %v514
        %518 = vmatprep.subr.bf16.mxu0 0
        %519 = vmatpush1.bf16.msra.mxu0 0
        %520 = vmatprep.subr.bf16.mxu0 0
        %521 = vmatpush1.bf16.msra.mxu0 0
        %522 = vmatprep.subr.bf16.mxu0 0
        %523 = vmatpush1.bf16.msra.mxu0 0
        %524 = vmatprep.subr.bf16.mxu0 0
        %525 = vmatpush1.bf16.msra.mxu0 0
        %526 = vmatprep.subr.bf16.mxu0 0
        %527 = vmatpush1.bf16.msra.mxu0 0
        %528 = vmatprep.subr.bf16.mxu0 0
        %529 = vmatpush1.bf16.msra.mxu0 0
        %530 = vmatprep.subr.bf16.mxu0 0
        %531 = vmatpush1.bf16.msra.mxu0 0
        %532 = vmatprep.subr.bf16.mxu0 0
        %533 = vmatpush1.bf16.msra.mxu0 0
        %534 = vmatprep.subr.bf16.mxu0 0
        %535 = vmatpush1.bf16.msra.mxu0 0
        %536 = vmatprep.subr.bf16.mxu0 0
        %537 = vmatpush1.bf16.msra.mxu0 0
        %538 = vmatprep.subr.bf16.mxu0 0
        %539 = vmatpush1.bf16.msra.mxu0 0
        %540 = vmatprep.subr.bf16.mxu0 0
        %541 = vmatpush1.bf16.msra.mxu0 0
        %542 = vmatprep.subr.bf16.mxu0 0
        %543 = vmatpush1.bf16.msra.mxu0 0
        %544 = vmatprep.subr.bf16.mxu0 0
        %545 = vmatpush1.bf16.msra.mxu0 0
        %546 = vmatprep.subr.bf16.mxu0 0
        %547 = vmatpush1.bf16.msra.mxu0 0
        %548 = vmatprep.mubr.bf16.mxu0 0
        %549 = vmatmul.mubr.bf16.gmra.mrb[0].mxu0 %v510
        %v550 = vpop.f32.mrb[0].mxu0
        %v551 = vadd.f32 0.0, %v550
        %v552 = vpop.f32.mrb[0].mxu0
        %v553 = vpop.f32.mrb[0].mxu0
        %v554 = vpop.f32.mrb[0].mxu0
        %555 = vdwg.mxu0
        %556 = vst.msk [vmem:[#allocation2] sm:$0xff] %vm447, %v551
        %557 = vrot.lane.b32.xlu0 %v443, 120
        %v558 = vpop.permute.xlu0 %557
        %559 = vrot.lane.b32.xlu0 %v443, 88
        %v560 = vpop.permute.xlu0 %559
        %v562 = vsel %vm447, %v558, 0
        %v565 = vsel %vm447, %v560, 0
        %567 = vmatprep.subr.bf16.mxu0 0
        %568 = vmatpush1.bf16.xpose.msra.mxu0 %v565
        %569 = vmatprep.subr.bf16.mxu0 0
        %570 = vmatpush1.bf16.xpose.msra.mxu0 0
        %571 = vmatprep.subr.bf16.mxu0 0
        %572 = vmatpush1.bf16.xpose.msra.mxu0 0
        %573 = vmatprep.subr.bf16.mxu0 0
        %574 = vmatpush1.bf16.xpose.msra.mxu0 0
        %575 = vmatprep.subr.bf16.mxu0 0
        %576 = vmatpush1.bf16.xpose.msra.mxu0 0
        %577 = vmatprep.subr.bf16.mxu0 0
        %578 = vmatpush1.bf16.xpose.msra.mxu0 0
        %579 = vmatprep.subr.bf16.mxu0 0
        %580 = vmatpush1.bf16.xpose.msra.mxu0 0
        %581 = vmatprep.subr.bf16.mxu0 0
        %582 = vmatpush1.bf16.xpose.msra.mxu0 0
        %583 = vmatprep.subr.bf16.mxu0 0
        %584 = vmatpush1.bf16.xpose.msra.mxu0 0
        %585 = vmatprep.subr.bf16.mxu0 0
        %586 = vmatpush1.bf16.xpose.msra.mxu0 0
        %587 = vmatprep.subr.bf16.mxu0 0
        %588 = vmatpush1.bf16.xpose.msra.mxu0 0
        %589 = vmatprep.subr.bf16.mxu0 0
        %590 = vmatpush1.bf16.xpose.msra.mxu0 0
        %591 = vmatprep.subr.bf16.mxu0 0
        %592 = vmatpush1.bf16.xpose.msra.mxu0 0
        %593 = vmatprep.subr.bf16.mxu0 0
        %594 = vmatpush1.bf16.xpose.msra.mxu0 0
        %595 = vmatprep.subr.bf16.mxu0 0
        %596 = vmatpush1.bf16.xpose.msra.mxu0 0
        %597 = vmatprep.subr.bf16.mxu0 0
        %598 = vmatpush1.bf16.xpose.msra.mxu0 0
        %599 = vmatprep.mubr.bf16.mxu0 0
        %600 = vmatmul.mubr.bf16.gmra.mrb[0].mxu0 %v562
        %v601 = vpop.f32.mrb[0].mxu0
        %v602 = vadd.f32 0.0, %v601
        %v603 = vpop.f32.mrb[0].mxu0
        %v604 = vpop.f32.mrb[0].mxu0
        %v605 = vpop.f32.mrb[0].mxu0
        %606 = vdwg.mxu0
        %v607 = vmul.f32 %v602, 0.35355338
        %v608 = vsel %vm447, %v607, -inf
        %609 = vmax.xlane.f32.xlu0 %v608
        %v610 = vpop.xlane.xlu0 %609
        %v611 = vsub.f32 %v607, %v610
        %v612 = vmul.f32 %v611, 1.442695
        %v613 = vpow.pop %v612
        %v614 = vsel %vm447, %v613, 0.0
        %615 = vadd.xlane.f32.xlu0 %v614
        %v616 = vpop.xlane.xlu0 %615
        %v617 = vrcp.pop %v616
        %v618 = vmul.f32 %v613, %v617
        %v619 = vpack.c.bf16 %v618, %v618
        %620 = vrot.lane.b32.xlu0 %v443, 56
        %v621 = vpop.permute.xlu0 %620
        %v623 = vsel %vm447, %v619, 0
        %v626 = vsel %vm512, %v621, 0
        %628 = vmatprep.subr.bf16.mxu0 0
        %629 = vmatpush1.bf16.msra.mxu0 %v626
        %630 = vmatprep.subr.bf16.mxu0 0
        %631 = vmatpush1.bf16.msra.mxu0 0
        %632 = vmatprep.subr.bf16.mxu0 0
        %633 = vmatpush1.bf16.msra.mxu0 0
        %634 = vmatprep.subr.bf16.mxu0 0
        %635 = vmatpush1.bf16.msra.mxu0 0
        %636 = vmatprep.subr.bf16.mxu0 0
        %637 = vmatpush1.bf16.msra.mxu0 0
        %638 = vmatprep.subr.bf16.mxu0 0
        %639 = vmatpush1.bf16.msra.mxu0 0
        %640 = vmatprep.subr.bf16.mxu0 0
        %641 = vmatpush1.bf16.msra.mxu0 0
        %642 = vmatprep.subr.bf16.mxu0 0
        %643 = vmatpush1.bf16.msra.mxu0 0
        %644 = vmatprep.subr.bf16.mxu0 0
        %645 = vmatpush1.bf16.msra.mxu0 0
        %646 = vmatprep.subr.bf16.mxu0 0
        %647 = vmatpush1.bf16.msra.mxu0 0
        %648 = vmatprep.subr.bf16.mxu0 0
        %649 = vmatpush1.bf16.msra.mxu0 0
        %650 = vmatprep.subr.bf16.mxu0 0
        %651 = vmatpush1.bf16.msra.mxu0 0
        %652 = vmatprep.subr.bf16.mxu0 0
        %653 = vmatpush1.bf16.msra.mxu0 0
        %654 = vmatprep.subr.bf16.mxu0 0
        %655 = vmatpush1.bf16.msra.mxu0 0
        %656 = vmatprep.subr.bf16.mxu0 0
        %657 = vmatpush1.bf16.msra.mxu0 0
        %658 = vmatprep.subr.bf16.mxu0 0
        %659 = vmatpush1.bf16.msra.mxu0 0
        %660 = vmatprep.mubr.bf16.mxu0 0
        %661 = vmatmul.mubr.bf16.gmra.mrb[0].mxu0 %v623
        %v662 = vpop.f32.mrb[0].mxu0
        %v663 = vadd.f32 0.0, %v662
        %v664 = vpop.f32.mrb[0].mxu0
        %v665 = vpop.f32.mrb[0].mxu0
        %v666 = vpop.f32.mrb[0].mxu0
        %667 = vdwg.mxu0
        %669 = vrot.lane.b32.xlu0 %v663, 8
        %v670 = vpop.permute.xlu0 %669
        %vm672 = vcmask 130112
        %673 = vst.msk [vmem:[#allocation2] sm:$0xff] %vm672, %v670
        %674 = vrot.lane.b32.xlu0 %v443, 112
        %v675 = vpop.permute.xlu0 %674
        %676 = vrot.lane.b32.xlu0 %v443, 80
        %v677 = vpop.permute.xlu0 %676
        %v679 = vsel %vm447, %v675, 0
        %v682 = vsel %vm447, %v677, 0
        %684 = vmatprep.subr.bf16.mxu0 0
        %685 = vmatpush1.bf16.xpose.msra.mxu0 %v682
        %686 = vmatprep.subr.bf16.mxu0 0
        %687 = vmatpush1.bf16.xpose.msra.mxu0 0
        %688 = vmatprep.subr.bf16.mxu0 0
        %689 = vmatpush1.bf16.xpose.msra.mxu0 0
        %690 = vmatprep.subr.bf16.mxu0 0
        %691 = vmatpush1.bf16.xpose.msra.mxu0 0
        %692 = vmatprep.subr.bf16.mxu0 0
        %693 = vmatpush1.bf16.xpose.msra.mxu0 0
        %694 = vmatprep.subr.bf16.mxu0 0
        %695 = vmatpush1.bf16.xpose.msra.mxu0 0
        %696 = vmatprep.subr.bf16.mxu0 0
        %697 = vmatpush1.bf16.xpose.msra.mxu0 0
        %698 = vmatprep.subr.bf16.mxu0 0
        %699 = vmatpush1.bf16.xpose.msra.mxu0 0
        %700 = vmatprep.subr.bf16.mxu0 0
        %701 = vmatpush1.bf16.xpose.msra.mxu0 0
        %702 = vmatprep.subr.bf16.mxu0 0
        %703 = vmatpush1.bf16.xpose.msra.mxu0 0
        %704 = vmatprep.subr.bf16.mxu0 0
        %705 = vmatpush1.bf16.xpose.msra.mxu0 0
        %706 = vmatprep.subr.bf16.mxu0 0
        %707 = vmatpush1.bf16.xpose.msra.mxu0 0
        %708 = vmatprep.subr.bf16.mxu0 0
        %709 = vmatpush1.bf16.xpose.msra.mxu0 0
        %710 = vmatprep.subr.bf16.mxu0 0
        %711 = vmatpush1.bf16.xpose.msra.mxu0 0
        %712 = vmatprep.subr.bf16.mxu0 0
        %713 = vmatpush1.bf16.xpose.msra.mxu0 0
        %714 = vmatprep.subr.bf16.mxu0 0
        %715 = vmatpush1.bf16.xpose.msra.mxu0 0
        %716 = vmatprep.mubr.bf16.mxu0 0
        %717 = vmatmul.mubr.bf16.gmra.mrb[0].mxu0 %v679
        %v718 = vpop.f32.mrb[0].mxu0
        %v719 = vadd.f32 0.0, %v718
        %v720 = vpop.f32.mrb[0].mxu0
        %v721 = vpop.f32.mrb[0].mxu0
        %v722 = vpop.f32.mrb[0].mxu0
        %723 = vdwg.mxu0
        %v724 = vmul.f32 %v719, 0.35355338
        %v725 = vsel %vm447, %v724, -inf
        %726 = vmax.xlane.f32.xlu0 %v725
        %v727 = vpop.xlane.xlu0 %726
        %v728 = vsub.f32 %v724, %v727
        %v729 = vmul.f32 %v728, 1.442695
        %v730 = vpow.pop %v729
        %v731 = vsel %vm447, %v730, 0.0
        %732 = vadd.xlane.f32.xlu0 %v731
        %v733 = vpop.xlane.xlu0 %732
        %v734 = vrcp.pop %v733
        %v735 = vmul.f32 %v730, %v734
        %v736 = vpack.c.bf16 %v735, %v735
        %737 = vrot.lane.b32.xlu0 %v443, 48
        %v738 = vpop.permute.xlu0 %737
        %v740 = vsel %vm447, %v736, 0
        %v743 = vsel %vm512, %v738, 0
        %745 = vmatprep.subr.bf16.mxu0 0
        %746 = vmatpush1.bf16.msra.mxu0 %v743
        %747 = vmatprep.subr.bf16.mxu0 0
        %748 = vmatpush1.bf16.msra.mxu0 0
        %749 = vmatprep.subr.bf16.mxu0 0
        %750 = vmatpush1.bf16.msra.mxu0 0
        %751 = vmatprep.subr.bf16.mxu0 0
        %752 = vmatpush1.bf16.msra.mxu0 0
        %753 = vmatprep.subr.bf16.mxu0 0
        %754 = vmatpush1.bf16.msra.mxu0 0
        %755 = vmatprep.subr.bf16.mxu0 0
        %756 = vmatpush1.bf16.msra.mxu0 0
        %757 = vmatprep.subr.bf16.mxu0 0
        %758 = vmatpush1.bf16.msra.mxu0 0
        %759 = vmatprep.subr.bf16.mxu0 0
        %760 = vmatpush1.bf16.msra.mxu0 0
        %761 = vmatprep.subr.bf16.mxu0 0
        %762 = vmatpush1.bf16.msra.mxu0 0
        %763 = vmatprep.subr.bf16.mxu0 0
        %764 = vmatpush1.bf16.msra.mxu0 0
        %765 = vmatprep.subr.bf16.mxu0 0
        %766 = vmatpush1.bf16.msra.mxu0 0
        %767 = vmatprep.subr.bf16.mxu0 0
        %768 = vmatpush1.bf16.msra.mxu0 0
        %769 = vmatprep.subr.bf16.mxu0 0
        %770 = vmatpush1.bf16.msra.mxu0 0
        %771 = vmatprep.subr.bf16.mxu0 0
        %772 = vmatpush1.bf16.msra.mxu0 0
        %773 = vmatprep.subr.bf16.mxu0 0
        %774 = vmatpush1.bf16.msra.mxu0 0
        %775 = vmatprep.subr.bf16.mxu0 0
        %776 = vmatpush1.bf16.msra.mxu0 0
        %777 = vmatprep.mubr.bf16.mxu0 0
        %778 = vmatmul.mubr.bf16.gmra.mrb[0].mxu0 %v740
        %v779 = vpop.f32.mrb[0].mxu0
        %v780 = vadd.f32 0.0, %v779
        %v781 = vpop.f32.mrb[0].mxu0
        %v782 = vpop.f32.mrb[0].mxu0
        %v783 = vpop.f32.mrb[0].mxu0
        %784 = vdwg.mxu0
        %786 = vrot.lane.b32.xlu0 %v780, 16
        %v787 = vpop.permute.xlu0 %786
        %vm789 = vcmask 195712
        %790 = vst.msk [vmem:[#allocation2] sm:$0xff] %vm789, %v787
        %791 = vrot.lane.b32.xlu0 %v443, 104
        %v792 = vpop.permute.xlu0 %791
        %793 = vrot.lane.b32.xlu0 %v443, 72
        %v794 = vpop.permute.xlu0 %793
        %v796 = vsel %vm447, %v792, 0
        %v799 = vsel %vm447, %v794, 0
        %801 = vmatprep.subr.bf16.mxu0 0
        %802 = vmatpush1.bf16.xpose.msra.mxu0 %v799
        %803 = vmatprep.subr.bf16.mxu0 0
        %804 = vmatpush1.bf16.xpose.msra.mxu0 0
        %805 = vmatprep.subr.bf16.mxu0 0
        %806 = vmatpush1.bf16.xpose.msra.mxu0 0
        %807 = vmatprep.subr.bf16.mxu0 0
        %808 = vmatpush1.bf16.xpose.msra.mxu0 0
        %809 = vmatprep.subr.bf16.mxu0 0
        %810 = vmatpush1.bf16.xpose.msra.mxu0 0
        %811 = vmatprep.subr.bf16.mxu0 0
        %812 = vmatpush1.bf16.xpose.msra.mxu0 0
        %813 = vmatprep.subr.bf16.mxu0 0
        %814 = vmatpush1.bf16.xpose.msra.mxu0 0
        %815 = vmatprep.subr.bf16.mxu0 0
        %816 = vmatpush1.bf16.xpose.msra.mxu0 0
        %817 = vmatprep.subr.bf16.mxu0 0
        %818 = vmatpush1.bf16.xpose.msra.mxu0 0
        %819 = vmatprep.subr.bf16.mxu0 0
        %820 = vmatpush1.bf16.xpose.msra.mxu0 0
        %821 = vmatprep.subr.bf16.mxu0 0
        %822 = vmatpush1.bf16.xpose.msra.mxu0 0
        %823 = vmatprep.subr.bf16.mxu0 0
        %824 = vmatpush1.bf16.xpose.msra.mxu0 0
        %825 = vmatprep.subr.bf16.mxu0 0
        %826 = vmatpush1.bf16.xpose.msra.mxu0 0
        %827 = vmatprep.subr.bf16.mxu0 0
        %828 = vmatpush1.bf16.xpose.msra.mxu0 0
        %829 = vmatprep.subr.bf16.mxu0 0
        %830 = vmatpush1.bf16.xpose.msra.mxu0 0
        %831 = vmatprep.subr.bf16.mxu0 0
        %832 = vmatpush1.bf16.xpose.msra.mxu0 0
        %833 = vmatprep.mubr.bf16.mxu0 0
        %834 = vmatmul.mubr.bf16.gmra.mrb[0].mxu0 %v796
        %v835 = vpop.f32.mrb[0].mxu0
        %v836 = vadd.f32 0.0, %v835
        %v837 = vpop.f32.mrb[0].mxu0
        %v838 = vpop.f32.mrb[0].mxu0
        %v839 = vpop.f32.mrb[0].mxu0
        %840 = vdwg.mxu0
        %v841 = vmul.f32 %v836, 0.35355338
        %v842 = vsel %vm447, %v841, -inf
        %843 = vmax.xlane.f32.xlu0 %v842
        %v844 = vpop.xlane.xlu0 %843
        %v845 = vsub.f32 %v841, %v844
        %v846 = vmul.f32 %v845, 1.442695
        %v847 = vpow.pop %v846
        %v848 = vsel %vm447, %v847, 0.0
        %849 = vadd.xlane.f32.xlu0 %v848
        %v850 = vpop.xlane.xlu0 %849
        %v851 = vrcp.pop %v850
        %v852 = vmul.f32 %v847, %v851
        %v853 = vpack.c.bf16 %v852, %v852
        %854 = vrot.lane.b32.xlu0 %v443, 40
        %v855 = vpop.permute.xlu0 %854
        %v857 = vsel %vm447, %v853, 0
        %v860 = vsel %vm512, %v855, 0
        %862 = vmatprep.subr.bf16.mxu0 0
        %863 = vmatpush1.bf16.msra.mxu0 %v860
        %864 = vmatprep.subr.bf16.mxu0 0
        %865 = vmatpush1.bf16.msra.mxu0 0
        %866 = vmatprep.subr.bf16.mxu0 0
        %867 = vmatpush1.bf16.msra.mxu0 0
        %868 = vmatprep.subr.bf16.mxu0 0
        %869 = vmatpush1.bf16.msra.mxu0 0
        %870 = vmatprep.subr.bf16.mxu0 0
        %871 = vmatpush1.bf16.msra.mxu0 0
        %872 = vmatprep.subr.bf16.mxu0 0
        %873 = vmatpush1.bf16.msra.mxu0 0
        %874 = vmatprep.subr.bf16.mxu0 0
        %875 = vmatpush1.bf16.msra.mxu0 0
        %876 = vmatprep.subr.bf16.mxu0 0
        %877 = vmatpush1.bf16.msra.mxu0 0
        %878 = vmatprep.subr.bf16.mxu0 0
        %879 = vmatpush1.bf16.msra.mxu0 0
        %880 = vmatprep.subr.bf16.mxu0 0
        %881 = vmatpush1.bf16.msra.mxu0 0
        %882 = vmatprep.subr.bf16.mxu0 0
        %883 = vmatpush1.bf16.msra.mxu0 0
        %884 = vmatprep.subr.bf16.mxu0 0
        %885 = vmatpush1.bf16.msra.mxu0 0
        %886 = vmatprep.subr.bf16.mxu0 0
        %887 = vmatpush1.bf16.msra.mxu0 0
        %888 = vmatprep.subr.bf16.mxu0 0
        %889 = vmatpush1.bf16.msra.mxu0 0
        %890 = vmatprep.subr.bf16.mxu0 0
        %891 = vmatpush1.bf16.msra.mxu0 0
        %892 = vmatprep.subr.bf16.mxu0 0
        %893 = vmatpush1.bf16.msra.mxu0 0
        %894 = vmatprep.mubr.bf16.mxu0 0
        %895 = vmatmul.mubr.bf16.gmra.mrb[0].mxu0 %v857
        %v896 = vpop.f32.mrb[0].mxu0
        %v897 = vadd.f32 0.0, %v896
        %v898 = vpop.f32.mrb[0].mxu0
        %v899 = vpop.f32.mrb[0].mxu0
        %v900 = vpop.f32.mrb[0].mxu0
        %901 = vdwg.mxu0
        %903 = vrot.lane.b32.xlu0 %v897, 24
        %v904 = vpop.permute.xlu0 %903
        %vm906 = vcmask 261312
        %907 = vst.msk [vmem:[#allocation2] sm:$0xff] %vm906, %v904
        %v908 = vld [vmem:[#allocation2] sm:$0xff]
        %v909 = vld [vmem:[#allocation9] sm:$0xf]
        %v910 = vld [vmem:[#allocation9 + $0x4] sm:$0xf]
        %v911 = vld [vmem:[#allocation9 + $0x8] sm:$0xf]
        %v912 = vld [vmem:[#allocation9 + $0xc] sm:$0xf]
        %v913 = vpack.c.bf16 %v908, %v908
        %v914 = vld [vmem:[#allocation11] sm:$0x1]
        %v916 = vlaneseq
        %v917 = vshrl.u32 %v916, 7
        %v918 = vsub.s32 0, %v917
        %v919 = vrot.slane %v914, %v918
        %v925 = vunpack.c.l.b16 %v909
        %v926 = vunpack.c.l.b16 %v910
        %v927 = vunpack.c.l.b16 %v911
        %v928 = vunpack.c.l.b16 %v912
        %v929 = vpack.c.b16 %v926, %v925
        %v930 = vpack.c.b16 %v928, %v927
        %v934 = vsel %vm399, %v913, 0
        %936 = vmatprep.subr.bf16.mxu0 0
        %937 = vmatpush1.bf16.msra.mxu0 %v929
        %938 = vmatprep.subr.bf16.mxu0 0
        %939 = vmatpush1.bf16.msra.mxu0 %v930
        %940 = vmatprep.subr.bf16.mxu0 0
        %941 = vmatpush1.bf16.msra.mxu0 0
        %942 = vmatprep.subr.bf16.mxu0 0
        %943 = vmatpush1.bf16.msra.mxu0 0
        %944 = vmatprep.subr.bf16.mxu0 0
        %945 = vmatpush1.bf16.msra.mxu0 0
        %946 = vmatprep.subr.bf16.mxu0 0
        %947 = vmatpush1.bf16.msra.mxu0 0
        %948 = vmatprep.subr.bf16.mxu0 0
        %949 = vmatpush1.bf16.msra.mxu0 0
        %950 = vmatprep.subr.bf16.mxu0 0
        %951 = vmatpush1.bf16.msra.mxu0 0
        %952 = vmatprep.subr.bf16.mxu0 0
        %953 = vmatpush1.bf16.msra.mxu0 0
        %954 = vmatprep.subr.bf16.mxu0 0
        %955 = vmatpush1.bf16.msra.mxu0 0
        %956 = vmatprep.subr.bf16.mxu0 0
        %957 = vmatpush1.bf16.msra.mxu0 0
        %958 = vmatprep.subr.bf16.mxu0 0
        %959 = vmatpush1.bf16.msra.mxu0 0
        %960 = vmatprep.subr.bf16.mxu0 0
        %961 = vmatpush1.bf16.msra.mxu0 0
        %962 = vmatprep.subr.bf16.mxu0 0
        %963 = vmatpush1.bf16.msra.mxu0 0
        %964 = vmatprep.subr.bf16.mxu0 0
        %965 = vmatpush1.bf16.msra.mxu0 0
        %966 = vmatprep.subr.bf16.mxu0 0
        %967 = vmatpush1.bf16.msra.mxu0 0
        %968 = vmatprep.mubr.bf16.mxu0 0
        %969 = vmatmul.mubr.bf16.gmra.mrb[0].mxu0 %v934
        %v970 = vpop.f32.mrb[0].mxu0
        %v971 = vadd.f32 %v919, %v970
        %v972 = vpop.f32.mrb[0].mxu0
        %v973 = vpop.f32.mrb[0].mxu0
        %v974 = vpop.f32.mrb[0].mxu0
        %975 = vdwg.mxu0
        %v976 = vadd.f32 %v971, %v374
        %v977 = vld [vmem:[#allocation12] sm:$0x1]
        %v978 = vld [vmem:[#allocation14] sm:$0x1]
        %v979 = vsel %vm399, %v976, 0.0
        %980 = vadd.xlane.f32.xlu0 %v979
        %v981 = vpop.xlane.xlu0 %980
        %v982 = vrcp.pop 32.0
        %v983 = vmul.f32 %v981, %v982
        %v984 = vsub.f32 %v976, %v983
        %v985 = vmul.f32 %v984, %v984
        %v986 = vsel %vm399, %v985, 0.0
        %987 = vadd.xlane.f32.xlu0 %v986
        %v988 = vpop.xlane.xlu0 %987
        %v989 = vmul.f32 %v988, %v982
        %v990 = vadd.f32 %v989, 1e-05
        %v991 = vrsqrt.pop %v990
        %v992 = vmul.f32 %v984, %v991
        %v994 = vlaneseq
        %v995 = vshrl.u32 %v994, 7
        %v996 = vsub.s32 0, %v995
        %v997 = vrot.slane %v977, %v996
        %v999 = vmul.f32 %v992, %v997
        %v1001 = vlaneseq
        %v1002 = vshrl.u32 %v1001, 7
        %v1003 = vsub.s32 0, %v1002
        %v1004 = vrot.slane %v978, %v1003
        %v1006 = vadd.f32 %v999, %v1004
        %1007 = vst.msk [vmem:[%s372] sm:$0xff] %vm399, %v1006
        %s1008 = sand.u32 %s187, 1
        %s1009 = scalar_lea.sflag [#allocation5], %s1008
        %s1010 = sand.u32 %s187, 1
        %s1011 = smul.addr %s1010, 8
        %s1012 = scalar_lea.vmem [#allocation15], %s1011
        // Predicated region
        $region77: #{tpu_custom_call.1} parent=47 // pred_check
          %p1013 = pneg %p197
        $region78: #{tpu_custom_call.1} parent=47 // pred_check_branch
          %1015 = sbr.rel (%p1013) target = $region80
        $region79: #{tpu_custom_call.1} parent=47 // pred_region
          %s1017 = ssub.s32 128, 128
          %1018 = vsyncadd %s1009, %s1017
          %s1019 = smul.addr %s27, 128
          %s1020 = scalar_lea.hbm %s7, %s1019
          %s1022 = sshll.u32 %s1012, 4
          %s1023 = int_to_ptr.vmem [resolvable:$true] %s1022
          %1025 = dma.vmem_to_hbm [thread:$0]  %s1023, 128, %s1020, %s1009
        $region80: #{tpu_custom_call.1} parent=47 // pred_fallthru
          _
      $region48: #{tpu_custom_call.1} parent=5 // pred_fallthru
        _
      %p1026 = scmp.le.s32.totalorder 2, %s22
      // Predicated region
      $region81: #{tpu_custom_call.1} parent=5 // pred_check
        %p1027 = pneg %p1026
      $region82: #{tpu_custom_call.1} parent=5 // pred_check_branch
        %1029 = sbr.rel (%p1027) target = $region84
      $region83: #{tpu_custom_call.1} parent=5 // pred_region
        %s1030 = ssub.s32 %s22, 2
        // Predicated region
        $region85: #{tpu_custom_call.1} parent=83 // pred_check
          %p1031 = pneg %p203
        $region86: #{tpu_custom_call.1} parent=83 // pred_check_branch
          %1033 = sbr.rel (%p1031) target = $region88
        $region87: #{tpu_custom_call.1} parent=83 // pred_region
          %s1034 = sand.u32 %s188, 1
          %s1035 = scalar_lea.sflag [#allocation5], %s1034
          %s1036 = sand.u32 %s188, 1
          %s1037 = smul.addr %s1036, 8
          %s1038 = scalar_lea.vmem [#allocation15], %s1037
          %1039 = dma.done %s1035, 128
        $region88: #{tpu_custom_call.1} parent=83 // pred_fallthru
          _
      $region84: #{tpu_custom_call.1} parent=5 // pred_fallthru
        _
    $region6: #{tpu_custom_call.1} parent=1 // loop_footer
      %s26 = sadd.s32 1, %s22
    $region7: #{tpu_custom_call.1} parent=1 // loop_footer_branch
      %21 = sbr.rel target = $region3
    $region8: #{tpu_custom_call.1} parent=1 // loop_exit
      _
    %1040 = vsyncpa [#allocation4], 1
    %s1041 = scalar_lea.sflag [#allocation4], 1
    %1042 = vsyncpa %s1041, 1
    %1043 = vsyncpa [#allocation7], 1
    %1044 = vsyncpa [#allocation10], 1
    %1045 = vsyncpa [#allocation13], 1
    %1046 = vsyncpa [#allocation5], 1
    %s1047 = scalar_lea.sflag [#allocation5], 1
    %1048 = vsyncpa %s1047, 1

</llo_original>
